<compile_context>
chip_gen: v7x
topology: tpu7x:2x2x1
jax: 0.10.0
libtpu: 0.0.40
codegen_flags: <defaults>
</compile_context>

<pallas_src>
import functools
import math

import numpy as np

import jax
import jax.numpy as jnp
from jax.experimental import pallas as pl
from jax.experimental.pallas import tpu as pltpu


# ----------------------------------------------------------------------------
# Fused whole-network kernel
# ----------------------------------------------------------------------------

def _dnn_kernel(*refs, n_blocks):
    """refs = [xe, xo, scalar_T, mask_l, mask_r, pool,
               stem(w,s,t), n_blocks x block(c1,c2,c3,down each (w,s,t)),
               fc(wc, wsc, b)], out_ref.  Everything VMEM-resident."""
    out_ref = refs[-1]
    it = iter(refs[:-1])

    xe_ref, xo_ref, sc_ref = next(it), next(it), next(it)
    ml_ref, mr_ref, pool_ref = next(it), next(it), next(it)

    f32, bf16 = jnp.float32, jnp.bfloat16
    mask_l = ml_ref[...]                       # (1, M) f32: zero at each element's left edge
    mask_r = mr_ref[...]                       # (1, M) f32: zero at each element's right edge
    m = mask_l.shape[-1]

    def take3():
        return next(it), next(it), next(it)

    def mdot(w_ref, a_bf16):                   # bf16 MXU matmul, f32 accumulation
        return jnp.dot(w_ref[...], a_bf16, preferred_element_type=f32)

    # +/-1 lane shifts: XLU roll + VPU mask multiply (no MXU, no O(M^2) constants).
    def shift_prev(x):                         # out[:, j] = x[:, j-1], 0 at left boundaries
        return pltpu.roll(x, shift=1, axis=1) * mask_l

    def shift_next(x):                         # out[:, j] = x[:, j+1], 0 at right boundaries
        return pltpu.roll(x, shift=m - 1, axis=1) * mask_r

    def conv_bn(h, w_ref, s_ref, t_ref):
        """Conv1d(k=3,s=1,p=1) + folded BN as ONE (cout,3cin)@(3cin,M) bf16 matmul."""
        stacked = jnp.concatenate([shift_prev(h), h, shift_next(h)], axis=0)
        y = mdot(w_ref, stacked.astype(bf16))
        return y * s_ref[...] + t_ref[...]

    # ---- stem: Conv + BN + ReLU + MaxPool(2,2), fused via even/odd streams ----
    ws_ref, ss_ref, ts_ref = take3()
    xe = xe_ref[...]                           # x[:, 2l]   -> (Cin, M) f32
    xo = xo_ref[...]                           # x[:, 2l+1] -> (Cin, M) f32
    stk_even = jnp.concatenate([shift_prev(xo), xe, xo], axis=0).astype(bf16)
    stk_odd = jnp.concatenate([xe, xo, shift_next(xe)], axis=0).astype(bf16)
    scale, offs = ss_ref[...], ts_ref[...]
    a_even = mdot(ws_ref, stk_even) * scale + offs
    a_odd = mdot(ws_ref, stk_odd) * scale + offs
    h = jnp.maximum(jnp.maximum(a_even, a_odd), 0.0)      # relu + maxpool fused

    # ---- ResNet blocks (all intermediates stay on-chip) ----
    for _ in range(n_blocks):
        w1, s1, t1 = take3()
        w2, s2, t2 = take3()
        w3, s3, t3 = take3()
        wd, sd, td = take3()
        identity = mdot(wd, h.astype(bf16)) * sd[...] + td[...]   # 1x1 conv + BN: one dot
        z = jnp.maximum(conv_bn(h, w1, s1, t1), 0.0)
        z = jnp.maximum(conv_bn(z, w2, s2, t2), 0.0)
        z = conv_bn(z, w3, s3, t3)
        h = jnp.maximum(z + identity, 0.0)

    # ---- head: avg pool (precomputed matrix) + concat(scalars) + Linear (f32, tiny) ----
    wc_ref, wsc_ref, b_ref = take3()
    pooled = jnp.dot(h, pool_ref[...], preferred_element_type=f32)         # (C4, N)
    logits_t = (jnp.dot(wc_ref[...], pooled, preferred_element_type=f32)
                + jnp.dot(wsc_ref[...], sc_ref[...], preferred_element_type=f32)
                + b_ref[...])
    out_ref[...] = logits_t.astype(out_ref.dtype)                          # (num_classes, N)


# ----------------------------------------------------------------------------
# Wrapper (single launch; only input/output layout plumbing at XLA level)
# ----------------------------------------------------------------------------

def _pack_conv3(w):
    """(cout, cin, 3) -> (cout, 3*cin) bf16, tap order matching [x_{j-1}; x_j; x_{j+1}]."""
    return jnp.concatenate([w[:, :, 0], w[:, :, 1], w[:, :, 2]], axis=1).astype(jnp.bfloat16)


def _prep_unit(w, scale, shift):
    ksize = w.shape[-1]
    wk = w[:, :, 0].astype(jnp.bfloat16) if ksize == 1 else _pack_conv3(w)
    return (wk,
            scale.reshape(-1, 1).astype(jnp.float32),
            shift.reshape(-1, 1).astype(jnp.float32))


def _vmem_limit_bytes(cin, c_max, m_pad, n_batch, n_scalar):
    """Footprint-derived VMEM budget (v7x physical VMEM is 64 MiB; don't hardcode)."""
    f32 = 4
    acts = f32 * m_pad * (2 * cin + 2)                    # xe, xo, masks
    acts += f32 * m_pad * (6 * c_max + 6 * c_max)         # live slabs + stacked conv operands
    consts = f32 * m_pad * n_batch                        # pool matrix
    weights = 2 * 12 * (3 * c_max * c_max)                # bf16 packed conv weights (generous)
    weights += f32 * 4 * c_max * (n_batch + n_scalar + 4)
    est = 2 * (acts + consts) + weights + (2 << 20)       # 2x headroom + fixed slack
    return int(min(60 << 20, max(16 << 20, est)))


def dnn_forward(x, scalar_features, params):
    n, cin, length = x.shape
    if length % 2 != 0:
        # TODO(synk): PyTorch MaxPool1d(2) floors odd lengths; only even L handled here.
        raise ValueError("sequence length must be even")
    l_half = length // 2
    m_real = n * l_half
    m_pad = max(128, ((m_real + 127) // 128) * 128)       # lane-dense activations
    fc_w, fc_b = params["fc"]
    num_classes = fc_w.shape[0]
    c4 = params["blocks"][-1][0][0].shape[0]

    # Layout plumbing on the tiny network input only: deinterleave even/odd columns
    # for the fused conv+maxpool stem, flatten batch into the lane dim, zero-pad to M_pad.
    # TODO(synk): for very large N*L do this split in-kernel (strided pl.ds) instead.
    xe = jnp.transpose(x[:, :, 0::2], (1, 0, 2)).reshape(cin, m_real)
    xo = jnp.transpose(x[:, :, 1::2], (1, 0, 2)).reshape(cin, m_real)
    pad = m_pad - m_real
    xe = jnp.pad(xe, ((0, 0), (0, pad))).astype(jnp.float32)
    xo = jnp.pad(xo, ((0, 0), (0, pad))).astype(jnp.float32)
    sc_t = jnp.transpose(scalar_features.astype(jnp.float32))          # (S, N)

    # Precomputed constants (previously built with O(M^2) iota/where inside the kernel).
    j = jnp.arange(m_pad)
    mask_l = (j % l_half != 0).astype(jnp.float32).reshape(1, m_pad)
    mask_r = (j % l_half != l_half - 1).astype(jnp.float32).reshape(1, m_pad)
    pool = jnp.where((j[:, None] // l_half) == jnp.arange(n)[None, :],
                     1.0 / l_half, 0.0).astype(jnp.float32)            # (M_pad, N)

    flat = list(_prep_unit(*params["stem"]))
    for blk in params["blocks"]:
        for unit in blk:
            flat.extend(_prep_unit(*unit))
    flat.extend([fc_w[:, :c4].astype(jnp.float32),
                 fc_w[:, c4:].astype(jnp.float32),
                 fc_b.reshape(num_classes, 1).astype(jnp.float32)])

    kernel = functools.partial(_dnn_kernel, n_blocks=len(params["blocks"]))
    out_t = pl.pallas_call(
        kernel,
        out_shape=jax.ShapeDtypeStruct((num_classes, n), jnp.float32),
        compiler_params=pltpu.CompilerParams(
            vmem_limit_bytes=_vmem_limit_bytes(cin, c4, m_pad, n, sc_t.shape[0])),
    )(xe, xo, sc_t, mask_l, mask_r, pool, *flat)
    return jnp.transpose(out_t)                                        # (N, num_classes)


# ----------------------------------------------------------------------------
# Parameters (shapes from the PyTorch module; inference-mode BN folded)
# ----------------------------------------------------------------------------

def _conv_bn_init(key, cin, cout, ksize=3, eps=1e-5):
    kw, kb, kg, kbe, km, kv = jax.random.split(key, 6)
    bound = 1.0 / math.sqrt(cin * ksize)
    w = jax.random.uniform(kw, (cout, cin, ksize), jnp.float32, -bound, bound)
    b = jax.random.uniform(kb, (cout,), jnp.float32, -bound, bound)
    gamma = jax.random.uniform(kg, (cout,), jnp.float32, 0.5, 1.5)
    beta = jax.random.uniform(kbe, (cout,), jnp.float32, -0.5, 0.5)
    mean = jax.random.uniform(km, (cout,), jnp.float32, -0.5, 0.5)
    var = jax.random.uniform(kv, (cout,), jnp.float32, 0.5, 1.5)
    scale = gamma / jnp.sqrt(var + eps)              # fold BN(running stats) + conv bias
    shift = scale * (b - mean) + beta
    return w, scale, shift


def _resblock_params(key, cin, cout):
    k1, k2, k3, kd = jax.random.split(key, 4)
    return (
        _conv_bn_init(k1, cin, cout, 3),             # conv1 + bn1  (cin -> cout)
        _conv_bn_init(k2, cout, cin, 3),             # conv2 + bn2  (cout -> cin)
        _conv_bn_init(k3, cin, cout, 3),             # conv3 + bn3  (cin -> cout)
        _conv_bn_init(kd, cin, cout, 1),             # downsample 1x1 conv + bn
    )


def make_params(key, in_channels, output_channels, num_scalar_features, num_classes=2):
    ks, k1, k2, k3, kfw, kfb = jax.random.split(key, 6)
    c4 = output_channels * 4
    fin = c4 + num_scalar_features
    bound = 1.0 / math.sqrt(fin)
    fc_w = jax.random.uniform(kfw, (num_classes, fin), jnp.float32, -bound, bound)
    fc_b = jax.random.uniform(kfb, (num_classes,), jnp.float32, -bound, bound)
    return {
        "stem": _conv_bn_init(ks, in_channels, in_channels, 3),
        "blocks": [
            _resblock_params(k1, in_channels, output_channels),
            _resblock_params(k2, output_channels, output_channels * 2),
            _resblock_params(k3, output_channels * 2, c4),
        ],
        "fc": (fc_w, fc_b),
    }


# ----------------------------------------------------------------------------
# Pure-JAX reference (same bf16-operand / f32-accumulate matmul numerics)
# ----------------------------------------------------------------------------

def dnn_reference(x, scalar_features, params):
    f32, bf16 = jnp.float32, jnp.bfloat16

    def conv3_bn(h, w, scale, shift):
        hb = h.astype(bf16)
        hm1 = jnp.pad(hb, ((0, 0), (0, 0), (1, 0)))[:, :, :-1]
        hp1 = jnp.pad(hb, ((0, 0), (0, 0), (0, 1)))[:, :, 1:]
        wb = w.astype(bf16)
        y = (jnp.einsum('oc,ncl->nol', wb[:, :, 0], hm1, preferred_element_type=f32)
             + jnp.einsum('oc,ncl->nol', wb[:, :, 1], hb, preferred_element_type=f32)
             + jnp.einsum('oc,ncl->nol', wb[:, :, 2], hp1, preferred_element_type=f32))
        return y * scale[None, :, None] + shift[None, :, None]

    def conv1_bn(h, w, scale, shift):
        y = jnp.einsum('oc,ncl->nol', w[:, :, 0].astype(bf16), h.astype(bf16),
                       preferred_element_type=f32)
        return y * scale[None, :, None] + shift[None, :, None]

    relu = lambda v: jnp.maximum(v, 0.0)

    w, s, t = params["stem"]
    h = relu(conv3_bn(x.astype(f32), w, s, t))
    n, c, l = h.shape
    h = jnp.max(h.reshape(n, c, l // 2, 2), axis=-1)
    for (w1, s1, t1), (w2, s2, t2), (w3, s3, t3), (wd, sd, td) in params["blocks"]:
        identity = conv1_bn(h, wd, sd, td)
        z = relu(conv3_bn(h, w1, s1, t1))
        z = relu(conv3_bn(z, w2, s2, t2))
        z = conv3_bn(z, w3, s3, t3)
        h = relu(z + identity)
    pooled = jnp.mean(h, axis=-1)
    feat = jnp.concatenate([pooled, scalar_features.astype(f32)], axis=1)
    fc_w, fc_b = params["fc"]
    return feat @ fc_w.T + fc_b


# ----------------------------------------------------------------------------
# Main
# ----------------------------------------------------------------------------

if __name__ == "__main__":
    N, L = 2, 16                  # batch, sequence length (even -> maxpool halves to 8)
    IN_CH, OUT_CH = 3, 16         # module: input_channels=3, output_channels=16
    NUM_SCALAR = 5

    root = jax.random.PRNGKey(0)
    kp, kx, ks = jax.random.split(root, 3)

    params = make_params(kp, IN_CH, OUT_CH, NUM_SCALAR)
    x = jax.random.normal(kx, (N, IN_CH, L), jnp.float32)
    scalar_features = jax.random.normal(ks, (N, NUM_SCALAR), jnp.float32)

    out = jax.jit(dnn_forward)(x, scalar_features, params)
    jax.block_until_ready(out)
    assert out.shape == (N, 2), out.shape

    ref = dnn_reference(x, scalar_features, params)
    np.testing.assert_allclose(np.asarray(out), np.asarray(ref), rtol=2e-2, atol=2e-2)
    print("KERNEL_OK")
</pallas_src>

<mosaic_0001>
module attributes {stable_mosaic.version = 11 : i64} {
  func.func @_dnn_kernel(%arg0: memref<3x128xf32, #tpu.memory_space<vmem>>, %arg1: memref<3x128xf32, #tpu.memory_space<vmem>>, %arg2: memref<5x2xf32, #tpu.memory_space<vmem>>, %arg3: memref<1x128xf32, #tpu.memory_space<vmem>>, %arg4: memref<1x128xf32, #tpu.memory_space<vmem>>, %arg5: memref<128x2xf32, #tpu.memory_space<vmem>>, %arg6: memref<3x9xbf16, #tpu.memory_space<vmem>>, %arg7: memref<3x1xf32, #tpu.memory_space<vmem>>, %arg8: memref<3x1xf32, #tpu.memory_space<vmem>>, %arg9: memref<16x9xbf16, #tpu.memory_space<vmem>>, %arg10: memref<16x1xf32, #tpu.memory_space<vmem>>, %arg11: memref<16x1xf32, #tpu.memory_space<vmem>>, %arg12: memref<3x48xbf16, #tpu.memory_space<vmem>>, %arg13: memref<3x1xf32, #tpu.memory_space<vmem>>, %arg14: memref<3x1xf32, #tpu.memory_space<vmem>>, %arg15: memref<16x9xbf16, #tpu.memory_space<vmem>>, %arg16: memref<16x1xf32, #tpu.memory_space<vmem>>, %arg17: memref<16x1xf32, #tpu.memory_space<vmem>>, %arg18: memref<16x3xbf16, #tpu.memory_space<vmem>>, %arg19: memref<16x1xf32, #tpu.memory_space<vmem>>, %arg20: memref<16x1xf32, #tpu.memory_space<vmem>>, %arg21: memref<32x48xbf16, #tpu.memory_space<vmem>>, %arg22: memref<32x1xf32, #tpu.memory_space<vmem>>, %arg23: memref<32x1xf32, #tpu.memory_space<vmem>>, %arg24: memref<16x96xbf16, #tpu.memory_space<vmem>>, %arg25: memref<16x1xf32, #tpu.memory_space<vmem>>, %arg26: memref<16x1xf32, #tpu.memory_space<vmem>>, %arg27: memref<32x48xbf16, #tpu.memory_space<vmem>>, %arg28: memref<32x1xf32, #tpu.memory_space<vmem>>, %arg29: memref<32x1xf32, #tpu.memory_space<vmem>>, %arg30: memref<32x16xbf16, #tpu.memory_space<vmem>>, %arg31: memref<32x1xf32, #tpu.memory_space<vmem>>, %arg32: memref<32x1xf32, #tpu.memory_space<vmem>>, %arg33: memref<64x96xbf16, #tpu.memory_space<vmem>>, %arg34: memref<64x1xf32, #tpu.memory_space<vmem>>, %arg35: memref<64x1xf32, #tpu.memory_space<vmem>>, %arg36: memref<32x192xbf16, #tpu.memory_space<vmem>>, %arg37: memref<32x1xf32, #tpu.memory_space<vmem>>, %arg38: memref<32x1xf32, #tpu.memory_space<vmem>>, %arg39: memref<64x96xbf16, #tpu.memory_space<vmem>>, %arg40: memref<64x1xf32, #tpu.memory_space<vmem>>, %arg41: memref<64x1xf32, #tpu.memory_space<vmem>>, %arg42: memref<64x32xbf16, #tpu.memory_space<vmem>>, %arg43: memref<64x1xf32, #tpu.memory_space<vmem>>, %arg44: memref<64x1xf32, #tpu.memory_space<vmem>>, %arg45: memref<2x64xf32, #tpu.memory_space<vmem>>, %arg46: memref<2x5xf32, #tpu.memory_space<vmem>>, %arg47: memref<2x1xf32, #tpu.memory_space<vmem>>, %arg48: memref<2x2xf32, #tpu.memory_space<vmem>>) attributes {dimension_semantics = [], scalar_prefetch = 0 : i64, scratch_operands = 0 : i64, tpu.core_type = #tpu.core_type<tc>} {
    %c0 = arith.constant 0 : index
    %c0_0 = arith.constant 0 : index
    %0 = vector.load %arg3[%c0, %c0_0] : memref<1x128xf32, #tpu.memory_space<vmem>>, vector<1x128xf32>
    %c0_1 = arith.constant 0 : index
    %c0_2 = arith.constant 0 : index
    %1 = vector.load %arg4[%c0_1, %c0_2] : memref<1x128xf32, #tpu.memory_space<vmem>>, vector<1x128xf32>
    %c0_3 = arith.constant 0 : index
    %c0_4 = arith.constant 0 : index
    %2 = vector.load %arg0[%c0_3, %c0_4] : memref<3x128xf32, #tpu.memory_space<vmem>>, vector<3x128xf32>
    %c0_5 = arith.constant 0 : index
    %c0_6 = arith.constant 0 : index
    %3 = vector.load %arg1[%c0_5, %c0_6] : memref<3x128xf32, #tpu.memory_space<vmem>>, vector<3x128xf32>
    %c1_i32 = arith.constant 1 : i32
    %4 = tpu.dynamic_rotate %3 by %c1_i32 dim 1 : vector<3x128xf32>, i32 -> vector<3x128xf32>
    %5 = vector.broadcast %0 : vector<1x128xf32> to vector<3x128xf32>
    %6 = arith.mulf %4, %5 : vector<3x128xf32>
    %7 = tpu.concatenate %6, %2, %3 in 0 : vector<3x128xf32>, vector<3x128xf32>, vector<3x128xf32> -> vector<9x128xf32>
    %8 = arith.truncf %7 : vector<9x128xf32> to vector<9x128xbf16>
    %c127_i32 = arith.constant 127 : i32
    %9 = tpu.dynamic_rotate %2 by %c127_i32 dim 1 : vector<3x128xf32>, i32 -> vector<3x128xf32>
    %10 = vector.broadcast %1 : vector<1x128xf32> to vector<3x128xf32>
    %11 = arith.mulf %9, %10 : vector<3x128xf32>
    %12 = tpu.concatenate %2, %3, %11 in 0 : vector<3x128xf32>, vector<3x128xf32>, vector<3x128xf32> -> vector<9x128xf32>
    %13 = arith.truncf %12 : vector<9x128xf32> to vector<9x128xbf16>
    %c0_7 = arith.constant 0 : index
    %c0_8 = arith.constant 0 : index
    %14 = vector.load %arg7[%c0_7, %c0_8] : memref<3x1xf32, #tpu.memory_space<vmem>>, vector<3x1xf32>
    %c0_9 = arith.constant 0 : index
    %c0_10 = arith.constant 0 : index
    %15 = vector.load %arg8[%c0_9, %c0_10] : memref<3x1xf32, #tpu.memory_space<vmem>>, vector<3x1xf32>
    %c0_11 = arith.constant 0 : index
    %c0_12 = arith.constant 0 : index
    %16 = vector.load %arg6[%c0_11, %c0_12] : memref<3x9xbf16, #tpu.memory_space<vmem>>, vector<3x9xbf16>
    %cst = arith.constant dense<0.000000e+00> : vector<3x128xf32>
    %17 = tpu.matmul %16, %8, %cst {dimension_numbers = #tpu.dot_dimension_numbers<[1], [0], [0], [1], [0, 0, 1, 1], [], []>} : vector<3x9xbf16>, vector<9x128xbf16>, vector<3x128xf32> -> vector<3x128xf32>
    %18 = vector.broadcast %14 : vector<3x1xf32> to vector<3x128xf32>
    %19 = arith.mulf %17, %18 : vector<3x128xf32>
    %20 = vector.broadcast %15 : vector<3x1xf32> to vector<3x128xf32>
    %21 = arith.addf %19, %20 : vector<3x128xf32>
    %c0_13 = arith.constant 0 : index
    %c0_14 = arith.constant 0 : index
    %22 = vector.load %arg6[%c0_13, %c0_14] : memref<3x9xbf16, #tpu.memory_space<vmem>>, vector<3x9xbf16>
    %cst_15 = arith.constant dense<0.000000e+00> : vector<3x128xf32>
    %23 = tpu.matmul %22, %13, %cst_15 {dimension_numbers = #tpu.dot_dimension_numbers<[1], [0], [0], [1], [0, 0, 1, 1], [], []>} : vector<3x9xbf16>, vector<9x128xbf16>, vector<3x128xf32> -> vector<3x128xf32>
    %24 = vector.broadcast %14 : vector<3x1xf32> to vector<3x128xf32>
    %25 = arith.mulf %23, %24 : vector<3x128xf32>
    %26 = vector.broadcast %15 : vector<3x1xf32> to vector<3x128xf32>
    %27 = arith.addf %25, %26 : vector<3x128xf32>
    %28 = arith.maximumf %21, %27 : vector<3x128xf32>
    %cst_16 = arith.constant 0.000000e+00 : f32
    %29 = vector.broadcast %cst_16 : f32 to vector<3x128xf32>
    %30 = arith.maximumf %28, %29 : vector<3x128xf32>
    %31 = arith.truncf %30 : vector<3x128xf32> to vector<3x128xbf16>
    %c0_17 = arith.constant 0 : index
    %c0_18 = arith.constant 0 : index
    %32 = vector.load %arg18[%c0_17, %c0_18] : memref<16x3xbf16, #tpu.memory_space<vmem>>, vector<16x3xbf16>
    %cst_19 = arith.constant dense<0.000000e+00> : vector<16x128xf32>
    %33 = tpu.matmul %32, %31, %cst_19 {dimension_numbers = #tpu.dot_dimension_numbers<[1], [0], [0], [1], [0, 0, 1, 1], [], []>} : vector<16x3xbf16>, vector<3x128xbf16>, vector<16x128xf32> -> vector<16x128xf32>
    %c0_20 = arith.constant 0 : index
    %c0_21 = arith.constant 0 : index
    %34 = vector.load %arg19[%c0_20, %c0_21] : memref<16x1xf32, #tpu.memory_space<vmem>>, vector<16x1xf32>
    %35 = vector.broadcast %34 : vector<16x1xf32> to vector<16x128xf32>
    %36 = arith.mulf %33, %35 : vector<16x128xf32>
    %c0_22 = arith.constant 0 : index
    %c0_23 = arith.constant 0 : index
    %37 = vector.load %arg20[%c0_22, %c0_23] : memref<16x1xf32, #tpu.memory_space<vmem>>, vector<16x1xf32>
    %38 = vector.broadcast %37 : vector<16x1xf32> to vector<16x128xf32>
    %39 = arith.addf %36, %38 : vector<16x128xf32>
    %c1_i32_24 = arith.constant 1 : i32
    %40 = tpu.dynamic_rotate %30 by %c1_i32_24 dim 1 : vector<3x128xf32>, i32 -> vector<3x128xf32>
    %41 = vector.broadcast %0 : vector<1x128xf32> to vector<3x128xf32>
    %42 = arith.mulf %40, %41 : vector<3x128xf32>
    %c127_i32_25 = arith.constant 127 : i32
    %43 = tpu.dynamic_rotate %30 by %c127_i32_25 dim 1 : vector<3x128xf32>, i32 -> vector<3x128xf32>
    %44 = vector.broadcast %1 : vector<1x128xf32> to vector<3x128xf32>
    %45 = arith.mulf %43, %44 : vector<3x128xf32>
    %46 = tpu.concatenate %42, %30, %45 in 0 : vector<3x128xf32>, vector<3x128xf32>, vector<3x128xf32> -> vector<9x128xf32>
    %47 = arith.truncf %46 : vector<9x128xf32> to vector<9x128xbf16>
    %c0_26 = arith.constant 0 : index
    %c0_27 = arith.constant 0 : index
    %48 = vector.load %arg9[%c0_26, %c0_27] : memref<16x9xbf16, #tpu.memory_space<vmem>>, vector<16x9xbf16>
    %cst_28 = arith.constant dense<0.000000e+00> : vector<16x128xf32>
    %49 = tpu.matmul %48, %47, %cst_28 {dimension_numbers = #tpu.dot_dimension_numbers<[1], [0], [0], [1], [0, 0, 1, 1], [], []>} : vector<16x9xbf16>, vector<9x128xbf16>, vector<16x128xf32> -> vector<16x128xf32>
    %c0_29 = arith.constant 0 : index
    %c0_30 = arith.constant 0 : index
    %50 = vector.load %arg10[%c0_29, %c0_30] : memref<16x1xf32, #tpu.memory_space<vmem>>, vector<16x1xf32>
    %51 = vector.broadcast %50 : vector<16x1xf32> to vector<16x128xf32>
    %52 = arith.mulf %49, %51 : vector<16x128xf32>
    %c0_31 = arith.constant 0 : index
    %c0_32 = arith.constant 0 : index
    %53 = vector.load %arg11[%c0_31, %c0_32] : memref<16x1xf32, #tpu.memory_space<vmem>>, vector<16x1xf32>
    %54 = vector.broadcast %53 : vector<16x1xf32> to vector<16x128xf32>
    %55 = arith.addf %52, %54 : vector<16x128xf32>
    %cst_33 = arith.constant 0.000000e+00 : f32
    %56 = vector.broadcast %cst_33 : f32 to vector<16x128xf32>
    %57 = arith.maximumf %55, %56 : vector<16x128xf32>
    %c1_i32_34 = arith.constant 1 : i32
    %58 = tpu.dynamic_rotate %57 by %c1_i32_34 dim 1 : vector<16x128xf32>, i32 -> vector<16x128xf32>
    %59 = vector.broadcast %0 : vector<1x128xf32> to vector<16x128xf32>
    %60 = arith.mulf %58, %59 : vector<16x128xf32>
    %c127_i32_35 = arith.constant 127 : i32
    %61 = tpu.dynamic_rotate %57 by %c127_i32_35 dim 1 : vector<16x128xf32>, i32 -> vector<16x128xf32>
    %62 = vector.broadcast %1 : vector<1x128xf32> to vector<16x128xf32>
    %63 = arith.mulf %61, %62 : vector<16x128xf32>
    %64 = tpu.concatenate %60, %57, %63 in 0 : vector<16x128xf32>, vector<16x128xf32>, vector<16x128xf32> -> vector<48x128xf32>
    %65 = arith.truncf %64 : vector<48x128xf32> to vector<48x128xbf16>
    %c0_36 = arith.constant 0 : index
    %c0_37 = arith.constant 0 : index
    %66 = vector.load %arg12[%c0_36, %c0_37] : memref<3x48xbf16, #tpu.memory_space<vmem>>, vector<3x48xbf16>
    %cst_38 = arith.constant dense<0.000000e+00> : vector<3x128xf32>
    %67 = tpu.matmul %66, %65, %cst_38 {dimension_numbers = #tpu.dot_dimension_numbers<[1], [0], [0], [1], [0, 0, 1, 1], [], []>} : vector<3x48xbf16>, vector<48x128xbf16>, vector<3x128xf32> -> vector<3x128xf32>
    %c0_39 = arith.constant 0 : index
    %c0_40 = arith.constant 0 : index
    %68 = vector.load %arg13[%c0_39, %c0_40] : memref<3x1xf32, #tpu.memory_space<vmem>>, vector<3x1xf32>
    %69 = vector.broadcast %68 : vector<3x1xf32> to vector<3x128xf32>
    %70 = arith.mulf %67, %69 : vector<3x128xf32>
    %c0_41 = arith.constant 0 : index
    %c0_42 = arith.constant 0 : index
    %71 = vector.load %arg14[%c0_41, %c0_42] : memref<3x1xf32, #tpu.memory_space<vmem>>, vector<3x1xf32>
    %72 = vector.broadcast %71 : vector<3x1xf32> to vector<3x128xf32>
    %73 = arith.addf %70, %72 : vector<3x128xf32>
    %cst_43 = arith.constant 0.000000e+00 : f32
    %74 = vector.broadcast %cst_43 : f32 to vector<3x128xf32>
    %75 = arith.maximumf %73, %74 : vector<3x128xf32>
    %c1_i32_44 = arith.constant 1 : i32
    %76 = tpu.dynamic_rotate %75 by %c1_i32_44 dim 1 : vector<3x128xf32>, i32 -> vector<3x128xf32>
    %77 = vector.broadcast %0 : vector<1x128xf32> to vector<3x128xf32>
    %78 = arith.mulf %76, %77 : vector<3x128xf32>
    %c127_i32_45 = arith.constant 127 : i32
    %79 = tpu.dynamic_rotate %75 by %c127_i32_45 dim 1 : vector<3x128xf32>, i32 -> vector<3x128xf32>
    %80 = vector.broadcast %1 : vector<1x128xf32> to vector<3x128xf32>
    %81 = arith.mulf %79, %80 : vector<3x128xf32>
    %82 = tpu.concatenate %78, %75, %81 in 0 : vector<3x128xf32>, vector<3x128xf32>, vector<3x128xf32> -> vector<9x128xf32>
    %83 = arith.truncf %82 : vector<9x128xf32> to vector<9x128xbf16>
    %c0_46 = arith.constant 0 : index
    %c0_47 = arith.constant 0 : index
    %84 = vector.load %arg15[%c0_46, %c0_47] : memref<16x9xbf16, #tpu.memory_space<vmem>>, vector<16x9xbf16>
    %cst_48 = arith.constant dense<0.000000e+00> : vector<16x128xf32>
    %85 = tpu.matmul %84, %83, %cst_48 {dimension_numbers = #tpu.dot_dimension_numbers<[1], [0], [0], [1], [0, 0, 1, 1], [], []>} : vector<16x9xbf16>, vector<9x128xbf16>, vector<16x128xf32> -> vector<16x128xf32>
    %c0_49 = arith.constant 0 : index
    %c0_50 = arith.constant 0 : index
    %86 = vector.load %arg16[%c0_49, %c0_50] : memref<16x1xf32, #tpu.memory_space<vmem>>, vector<16x1xf32>
    %87 = vector.broadcast %86 : vector<16x1xf32> to vector<16x128xf32>
    %88 = arith.mulf %85, %87 : vector<16x128xf32>
    %c0_51 = arith.constant 0 : index
    %c0_52 = arith.constant 0 : index
    %89 = vector.load %arg17[%c0_51, %c0_52] : memref<16x1xf32, #tpu.memory_space<vmem>>, vector<16x1xf32>
    %90 = vector.broadcast %89 : vector<16x1xf32> to vector<16x128xf32>
    %91 = arith.addf %88, %90 : vector<16x128xf32>
    %92 = arith.addf %91, %39 : vector<16x128xf32>
    %cst_53 = arith.constant 0.000000e+00 : f32
    %93 = vector.broadcast %cst_53 : f32 to vector<16x128xf32>
    %94 = arith.maximumf %92, %93 : vector<16x128xf32>
    %95 = arith.truncf %94 : vector<16x128xf32> to vector<16x128xbf16>
    %c0_54 = arith.constant 0 : index
    %c0_55 = arith.constant 0 : index
    %96 = vector.load %arg30[%c0_54, %c0_55] : memref<32x16xbf16, #tpu.memory_space<vmem>>, vector<32x16xbf16>
    %cst_56 = arith.constant dense<0.000000e+00> : vector<32x128xf32>
    %97 = tpu.matmul %96, %95, %cst_56 {dimension_numbers = #tpu.dot_dimension_numbers<[1], [0], [0], [1], [0, 0, 1, 1], [], []>} : vector<32x16xbf16>, vector<16x128xbf16>, vector<32x128xf32> -> vector<32x128xf32>
    %c0_57 = arith.constant 0 : index
    %c0_58 = arith.constant 0 : index
    %98 = vector.load %arg31[%c0_57, %c0_58] : memref<32x1xf32, #tpu.memory_space<vmem>>, vector<32x1xf32>
    %99 = vector.broadcast %98 : vector<32x1xf32> to vector<32x128xf32>
    %100 = arith.mulf %97, %99 : vector<32x128xf32>
    %c0_59 = arith.constant 0 : index
    %c0_60 = arith.constant 0 : index
    %101 = vector.load %arg32[%c0_59, %c0_60] : memref<32x1xf32, #tpu.memory_space<vmem>>, vector<32x1xf32>
    %102 = vector.broadcast %101 : vector<32x1xf32> to vector<32x128xf32>
    %103 = arith.addf %100, %102 : vector<32x128xf32>
    %c1_i32_61 = arith.constant 1 : i32
    %104 = tpu.dynamic_rotate %94 by %c1_i32_61 dim 1 : vector<16x128xf32>, i32 -> vector<16x128xf32>
    %105 = vector.broadcast %0 : vector<1x128xf32> to vector<16x128xf32>
    %106 = arith.mulf %104, %105 : vector<16x128xf32>
    %c127_i32_62 = arith.constant 127 : i32
    %107 = tpu.dynamic_rotate %94 by %c127_i32_62 dim 1 : vector<16x128xf32>, i32 -> vector<16x128xf32>
    %108 = vector.broadcast %1 : vector<1x128xf32> to vector<16x128xf32>
    %109 = arith.mulf %107, %108 : vector<16x128xf32>
    %110 = tpu.concatenate %106, %94, %109 in 0 : vector<16x128xf32>, vector<16x128xf32>, vector<16x128xf32> -> vector<48x128xf32>
    %111 = arith.truncf %110 : vector<48x128xf32> to vector<48x128xbf16>
    %c0_63 = arith.constant 0 : index
    %c0_64 = arith.constant 0 : index
    %112 = vector.load %arg21[%c0_63, %c0_64] : memref<32x48xbf16, #tpu.memory_space<vmem>>, vector<32x48xbf16>
    %cst_65 = arith.constant dense<0.000000e+00> : vector<32x128xf32>
    %113 = tpu.matmul %112, %111, %cst_65 {dimension_numbers = #tpu.dot_dimension_numbers<[1], [0], [0], [1], [0, 0, 1, 1], [], []>} : vector<32x48xbf16>, vector<48x128xbf16>, vector<32x128xf32> -> vector<32x128xf32>
    %c0_66 = arith.constant 0 : index
    %c0_67 = arith.constant 0 : index
    %114 = vector.load %arg22[%c0_66, %c0_67] : memref<32x1xf32, #tpu.memory_space<vmem>>, vector<32x1xf32>
    %115 = vector.broadcast %114 : vector<32x1xf32> to vector<32x128xf32>
    %116 = arith.mulf %113, %115 : vector<32x128xf32>
    %c0_68 = arith.constant 0 : index
    %c0_69 = arith.constant 0 : index
    %117 = vector.load %arg23[%c0_68, %c0_69] : memref<32x1xf32, #tpu.memory_space<vmem>>, vector<32x1xf32>
    %118 = vector.broadcast %117 : vector<32x1xf32> to vector<32x128xf32>
    %119 = arith.addf %116, %118 : vector<32x128xf32>
    %cst_70 = arith.constant 0.000000e+00 : f32
    %120 = vector.broadcast %cst_70 : f32 to vector<32x128xf32>
    %121 = arith.maximumf %119, %120 : vector<32x128xf32>
    %c1_i32_71 = arith.constant 1 : i32
    %122 = tpu.dynamic_rotate %121 by %c1_i32_71 dim 1 : vector<32x128xf32>, i32 -> vector<32x128xf32>
    %123 = vector.broadcast %0 : vector<1x128xf32> to vector<32x128xf32>
    %124 = arith.mulf %122, %123 : vector<32x128xf32>
    %c127_i32_72 = arith.constant 127 : i32
    %125 = tpu.dynamic_rotate %121 by %c127_i32_72 dim 1 : vector<32x128xf32>, i32 -> vector<32x128xf32>
    %126 = vector.broadcast %1 : vector<1x128xf32> to vector<32x128xf32>
    %127 = arith.mulf %125, %126 : vector<32x128xf32>
    %128 = tpu.concatenate %124, %121, %127 in 0 : vector<32x128xf32>, vector<32x128xf32>, vector<32x128xf32> -> vector<96x128xf32>
    %129 = arith.truncf %128 : vector<96x128xf32> to vector<96x128xbf16>
    %c0_73 = arith.constant 0 : index
    %c0_74 = arith.constant 0 : index
    %130 = vector.load %arg24[%c0_73, %c0_74] : memref<16x96xbf16, #tpu.memory_space<vmem>>, vector<16x96xbf16>
    %cst_75 = arith.constant dense<0.000000e+00> : vector<16x128xf32>
    %131 = tpu.matmul %130, %129, %cst_75 {dimension_numbers = #tpu.dot_dimension_numbers<[1], [0], [0], [1], [0, 0, 1, 1], [], []>} : vector<16x96xbf16>, vector<96x128xbf16>, vector<16x128xf32> -> vector<16x128xf32>
    %c0_76 = arith.constant 0 : index
    %c0_77 = arith.constant 0 : index
    %132 = vector.load %arg25[%c0_76, %c0_77] : memref<16x1xf32, #tpu.memory_space<vmem>>, vector<16x1xf32>
    %133 = vector.broadcast %132 : vector<16x1xf32> to vector<16x128xf32>
    %134 = arith.mulf %131, %133 : vector<16x128xf32>
    %c0_78 = arith.constant 0 : index
    %c0_79 = arith.constant 0 : index
    %135 = vector.load %arg26[%c0_78, %c0_79] : memref<16x1xf32, #tpu.memory_space<vmem>>, vector<16x1xf32>
    %136 = vector.broadcast %135 : vector<16x1xf32> to vector<16x128xf32>
    %137 = arith.addf %134, %136 : vector<16x128xf32>
    %cst_80 = arith.constant 0.000000e+00 : f32
    %138 = vector.broadcast %cst_80 : f32 to vector<16x128xf32>
    %139 = arith.maximumf %137, %138 : vector<16x128xf32>
    %c1_i32_81 = arith.constant 1 : i32
    %140 = tpu.dynamic_rotate %139 by %c1_i32_81 dim 1 : vector<16x128xf32>, i32 -> vector<16x128xf32>
    %141 = vector.broadcast %0 : vector<1x128xf32> to vector<16x128xf32>
    %142 = arith.mulf %140, %141 : vector<16x128xf32>
    %c127_i32_82 = arith.constant 127 : i32
    %143 = tpu.dynamic_rotate %139 by %c127_i32_82 dim 1 : vector<16x128xf32>, i32 -> vector<16x128xf32>
    %144 = vector.broadcast %1 : vector<1x128xf32> to vector<16x128xf32>
    %145 = arith.mulf %143, %144 : vector<16x128xf32>
    %146 = tpu.concatenate %142, %139, %145 in 0 : vector<16x128xf32>, vector<16x128xf32>, vector<16x128xf32> -> vector<48x128xf32>
    %147 = arith.truncf %146 : vector<48x128xf32> to vector<48x128xbf16>
    %c0_83 = arith.constant 0 : index
    %c0_84 = arith.constant 0 : index
    %148 = vector.load %arg27[%c0_83, %c0_84] : memref<32x48xbf16, #tpu.memory_space<vmem>>, vector<32x48xbf16>
    %cst_85 = arith.constant dense<0.000000e+00> : vector<32x128xf32>
    %149 = tpu.matmul %148, %147, %cst_85 {dimension_numbers = #tpu.dot_dimension_numbers<[1], [0], [0], [1], [0, 0, 1, 1], [], []>} : vector<32x48xbf16>, vector<48x128xbf16>, vector<32x128xf32> -> vector<32x128xf32>
    %c0_86 = arith.constant 0 : index
    %c0_87 = arith.constant 0 : index
    %150 = vector.load %arg28[%c0_86, %c0_87] : memref<32x1xf32, #tpu.memory_space<vmem>>, vector<32x1xf32>
    %151 = vector.broadcast %150 : vector<32x1xf32> to vector<32x128xf32>
    %152 = arith.mulf %149, %151 : vector<32x128xf32>
    %c0_88 = arith.constant 0 : index
    %c0_89 = arith.constant 0 : index
    %153 = vector.load %arg29[%c0_88, %c0_89] : memref<32x1xf32, #tpu.memory_space<vmem>>, vector<32x1xf32>
    %154 = vector.broadcast %153 : vector<32x1xf32> to vector<32x128xf32>
    %155 = arith.addf %152, %154 : vector<32x128xf32>
    %156 = arith.addf %155, %103 : vector<32x128xf32>
    %cst_90 = arith.constant 0.000000e+00 : f32
    %157 = vector.broadcast %cst_90 : f32 to vector<32x128xf32>
    %158 = arith.maximumf %156, %157 : vector<32x128xf32>
    %159 = arith.truncf %158 : vector<32x128xf32> to vector<32x128xbf16>
    %c0_91 = arith.constant 0 : index
    %c0_92 = arith.constant 0 : index
    %160 = vector.load %arg42[%c0_91, %c0_92] : memref<64x32xbf16, #tpu.memory_space<vmem>>, vector<64x32xbf16>
    %cst_93 = arith.constant dense<0.000000e+00> : vector<64x128xf32>
    %161 = tpu.matmul %160, %159, %cst_93 {dimension_numbers = #tpu.dot_dimension_numbers<[1], [0], [0], [1], [0, 0, 1, 1], [], []>} : vector<64x32xbf16>, vector<32x128xbf16>, vector<64x128xf32> -> vector<64x128xf32>
    %c0_94 = arith.constant 0 : index
    %c0_95 = arith.constant 0 : index
    %162 = vector.load %arg43[%c0_94, %c0_95] : memref<64x1xf32, #tpu.memory_space<vmem>>, vector<64x1xf32>
    %163 = vector.broadcast %162 : vector<64x1xf32> to vector<64x128xf32>
    %164 = arith.mulf %161, %163 : vector<64x128xf32>
    %c0_96 = arith.constant 0 : index
    %c0_97 = arith.constant 0 : index
    %165 = vector.load %arg44[%c0_96, %c0_97] : memref<64x1xf32, #tpu.memory_space<vmem>>, vector<64x1xf32>
    %166 = vector.broadcast %165 : vector<64x1xf32> to vector<64x128xf32>
    %167 = arith.addf %164, %166 : vector<64x128xf32>
    %c1_i32_98 = arith.constant 1 : i32
    %168 = tpu.dynamic_rotate %158 by %c1_i32_98 dim 1 : vector<32x128xf32>, i32 -> vector<32x128xf32>
    %169 = vector.broadcast %0 : vector<1x128xf32> to vector<32x128xf32>
    %170 = arith.mulf %168, %169 : vector<32x128xf32>
    %c127_i32_99 = arith.constant 127 : i32
    %171 = tpu.dynamic_rotate %158 by %c127_i32_99 dim 1 : vector<32x128xf32>, i32 -> vector<32x128xf32>
    %172 = vector.broadcast %1 : vector<1x128xf32> to vector<32x128xf32>
    %173 = arith.mulf %171, %172 : vector<32x128xf32>
    %174 = tpu.concatenate %170, %158, %173 in 0 : vector<32x128xf32>, vector<32x128xf32>, vector<32x128xf32> -> vector<96x128xf32>
    %175 = arith.truncf %174 : vector<96x128xf32> to vector<96x128xbf16>
    %c0_100 = arith.constant 0 : index
    %c0_101 = arith.constant 0 : index
    %176 = vector.load %arg33[%c0_100, %c0_101] : memref<64x96xbf16, #tpu.memory_space<vmem>>, vector<64x96xbf16>
    %cst_102 = arith.constant dense<0.000000e+00> : vector<64x128xf32>
    %177 = tpu.matmul %176, %175, %cst_102 {dimension_numbers = #tpu.dot_dimension_numbers<[1], [0], [0], [1], [0, 0, 1, 1], [], []>} : vector<64x96xbf16>, vector<96x128xbf16>, vector<64x128xf32> -> vector<64x128xf32>
    %c0_103 = arith.constant 0 : index
    %c0_104 = arith.constant 0 : index
    %178 = vector.load %arg34[%c0_103, %c0_104] : memref<64x1xf32, #tpu.memory_space<vmem>>, vector<64x1xf32>
    %179 = vector.broadcast %178 : vector<64x1xf32> to vector<64x128xf32>
    %180 = arith.mulf %177, %179 : vector<64x128xf32>
    %c0_105 = arith.constant 0 : index
    %c0_106 = arith.constant 0 : index
    %181 = vector.load %arg35[%c0_105, %c0_106] : memref<64x1xf32, #tpu.memory_space<vmem>>, vector<64x1xf32>
    %182 = vector.broadcast %181 : vector<64x1xf32> to vector<64x128xf32>
    %183 = arith.addf %180, %182 : vector<64x128xf32>
    %cst_107 = arith.constant 0.000000e+00 : f32
    %184 = vector.broadcast %cst_107 : f32 to vector<64x128xf32>
    %185 = arith.maximumf %183, %184 : vector<64x128xf32>
    %c1_i32_108 = arith.constant 1 : i32
    %186 = tpu.dynamic_rotate %185 by %c1_i32_108 dim 1 : vector<64x128xf32>, i32 -> vector<64x128xf32>
    %187 = vector.broadcast %0 : vector<1x128xf32> to vector<64x128xf32>
    %188 = arith.mulf %186, %187 : vector<64x128xf32>
    %c127_i32_109 = arith.constant 127 : i32
    %189 = tpu.dynamic_rotate %185 by %c127_i32_109 dim 1 : vector<64x128xf32>, i32 -> vector<64x128xf32>
    %190 = vector.broadcast %1 : vector<1x128xf32> to vector<64x128xf32>
    %191 = arith.mulf %189, %190 : vector<64x128xf32>
    %192 = tpu.concatenate %188, %185, %191 in 0 : vector<64x128xf32>, vector<64x128xf32>, vector<64x128xf32> -> vector<192x128xf32>
    %193 = arith.truncf %192 : vector<192x128xf32> to vector<192x128xbf16>
    %c0_110 = arith.constant 0 : index
    %c0_111 = arith.constant 0 : index
    %194 = vector.load %arg36[%c0_110, %c0_111] : memref<32x192xbf16, #tpu.memory_space<vmem>>, vector<32x192xbf16>
    %cst_112 = arith.constant dense<0.000000e+00> : vector<32x128xf32>
    %195 = tpu.matmul %194, %193, %cst_112 {dimension_numbers = #tpu.dot_dimension_numbers<[1], [0], [0], [1], [0, 0, 1, 1], [], []>} : vector<32x192xbf16>, vector<192x128xbf16>, vector<32x128xf32> -> vector<32x128xf32>
    %c0_113 = arith.constant 0 : index
    %c0_114 = arith.constant 0 : index
    %196 = vector.load %arg37[%c0_113, %c0_114] : memref<32x1xf32, #tpu.memory_space<vmem>>, vector<32x1xf32>
    %197 = vector.broadcast %196 : vector<32x1xf32> to vector<32x128xf32>
    %198 = arith.mulf %195, %197 : vector<32x128xf32>
    %c0_115 = arith.constant 0 : index
    %c0_116 = arith.constant 0 : index
    %199 = vector.load %arg38[%c0_115, %c0_116] : memref<32x1xf32, #tpu.memory_space<vmem>>, vector<32x1xf32>
    %200 = vector.broadcast %199 : vector<32x1xf32> to vector<32x128xf32>
    %201 = arith.addf %198, %200 : vector<32x128xf32>
    %cst_117 = arith.constant 0.000000e+00 : f32
    %202 = vector.broadcast %cst_117 : f32 to vector<32x128xf32>
    %203 = arith.maximumf %201, %202 : vector<32x128xf32>
    %c1_i32_118 = arith.constant 1 : i32
    %204 = tpu.dynamic_rotate %203 by %c1_i32_118 dim 1 : vector<32x128xf32>, i32 -> vector<32x128xf32>
    %205 = vector.broadcast %0 : vector<1x128xf32> to vector<32x128xf32>
    %206 = arith.mulf %204, %205 : vector<32x128xf32>
    %c127_i32_119 = arith.constant 127 : i32
    %207 = tpu.dynamic_rotate %203 by %c127_i32_119 dim 1 : vector<32x128xf32>, i32 -> vector<32x128xf32>
    %208 = vector.broadcast %1 : vector<1x128xf32> to vector<32x128xf32>
    %209 = arith.mulf %207, %208 : vector<32x128xf32>
    %210 = tpu.concatenate %206, %203, %209 in 0 : vector<32x128xf32>, vector<32x128xf32>, vector<32x128xf32> -> vector<96x128xf32>
    %211 = arith.truncf %210 : vector<96x128xf32> to vector<96x128xbf16>
    %c0_120 = arith.constant 0 : index
    %c0_121 = arith.constant 0 : index
    %212 = vector.load %arg39[%c0_120, %c0_121] : memref<64x96xbf16, #tpu.memory_space<vmem>>, vector<64x96xbf16>
    %cst_122 = arith.constant dense<0.000000e+00> : vector<64x128xf32>
    %213 = tpu.matmul %212, %211, %cst_122 {dimension_numbers = #tpu.dot_dimension_numbers<[1], [0], [0], [1], [0, 0, 1, 1], [], []>} : vector<64x96xbf16>, vector<96x128xbf16>, vector<64x128xf32> -> vector<64x128xf32>
    %c0_123 = arith.constant 0 : index
    %c0_124 = arith.constant 0 : index
    %214 = vector.load %arg40[%c0_123, %c0_124] : memref<64x1xf32, #tpu.memory_space<vmem>>, vector<64x1xf32>
    %215 = vector.broadcast %214 : vector<64x1xf32> to vector<64x128xf32>
    %216 = arith.mulf %213, %215 : vector<64x128xf32>
    %c0_125 = arith.constant 0 : index
    %c0_126 = arith.constant 0 : index
    %217 = vector.load %arg41[%c0_125, %c0_126] : memref<64x1xf32, #tpu.memory_space<vmem>>, vector<64x1xf32>
    %218 = vector.broadcast %217 : vector<64x1xf32> to vector<64x128xf32>
    %219 = arith.addf %216, %218 : vector<64x128xf32>
    %220 = arith.addf %219, %167 : vector<64x128xf32>
    %cst_127 = arith.constant 0.000000e+00 : f32
    %221 = vector.broadcast %cst_127 : f32 to vector<64x128xf32>
    %222 = arith.maximumf %220, %221 : vector<64x128xf32>
    %c0_128 = arith.constant 0 : index
    %c0_129 = arith.constant 0 : index
    %223 = vector.load %arg5[%c0_128, %c0_129] : memref<128x2xf32, #tpu.memory_space<vmem>>, vector<128x2xf32>
    %cst_130 = arith.constant dense<0.000000e+00> : vector<64x2xf32>
    %224 = tpu.matmul %222, %223, %cst_130 {dimension_numbers = #tpu.dot_dimension_numbers<[1], [0], [0], [1], [0, 0, 1, 1], [], []>} : vector<64x128xf32>, vector<128x2xf32>, vector<64x2xf32> -> vector<64x2xf32>
    %c0_131 = arith.constant 0 : index
    %c0_132 = arith.constant 0 : index
    %225 = vector.load %arg45[%c0_131, %c0_132] : memref<2x64xf32, #tpu.memory_space<vmem>>, vector<2x64xf32>
    %cst_133 = arith.constant dense<0.000000e+00> : vector<2x2xf32>
    %226 = tpu.matmul %225, %224, %cst_133 {dimension_numbers = #tpu.dot_dimension_numbers<[1], [0], [0], [1], [0, 0, 1, 1], [], []>} : vector<2x64xf32>, vector<64x2xf32>, vector<2x2xf32> -> vector<2x2xf32>
    %c0_134 = arith.constant 0 : index
    %c0_135 = arith.constant 0 : index
    %227 = vector.load %arg46[%c0_134, %c0_135] : memref<2x5xf32, #tpu.memory_space<vmem>>, vector<2x5xf32>
    %c0_136 = arith.constant 0 : index
    %c0_137 = arith.constant 0 : index
    %228 = vector.load %arg2[%c0_136, %c0_137] : memref<5x2xf32, #tpu.memory_space<vmem>>, vector<5x2xf32>
    %cst_138 = arith.constant dense<0.000000e+00> : vector<2x2xf32>
    %229 = tpu.matmul %227, %228, %cst_138 {dimension_numbers = #tpu.dot_dimension_numbers<[1], [0], [0], [1], [0, 0, 1, 1], [], []>} : vector<2x5xf32>, vector<5x2xf32>, vector<2x2xf32> -> vector<2x2xf32>
    %230 = arith.addf %226, %229 : vector<2x2xf32>
    %c0_139 = arith.constant 0 : index
    %c0_140 = arith.constant 0 : index
    %231 = vector.load %arg47[%c0_139, %c0_140] : memref<2x1xf32, #tpu.memory_space<vmem>>, vector<2x1xf32>
    %232 = vector.broadcast %231 : vector<2x1xf32> to vector<2x2xf32>
    %233 = arith.addf %230, %232 : vector<2x2xf32>
    %c0_141 = arith.constant 0 : index
    %c0_142 = arith.constant 0 : index
    %234 = vector.load %arg48[%c0_141, %c0_142] : memref<2x2xf32, #tpu.memory_space<vmem>>, vector<2x2xf32>
    tpu.vector_store %arg48[%c0_141, %c0_142], %233 {strides = array<i32>} : memref<2x2xf32, #tpu.memory_space<vmem>>, vector<2x2xf32>,
    return
  }
}

</mosaic_0001>

<llo_original>
// kernel: dnn_forward.1
$region0: #{dnn_forward.1}
  #allocation0 [shape = 'u32[]', space=smem, size = 0x4, offset = 0x4, fixed_abs, tag = 'smem constant byte address 0x4 - core index']
  #allocation1 [shape = 'u32[144,128]{1,0:T(1,128)}', space=vmem, size = 0x12000, scoped, tag = 'internal scratch']
  %s0 = inlined_call_operand.smem [shape: u32[49], index: -1, kind: input, shape index: {}]
  %s1 = sld [smem:[%s0]]
  %s2 = scalar_lea.smem %s0, 1
  %s3 = sld [smem:[%s2]]
  %s4 = scalar_lea.smem %s0, 2
  %s5 = sld [smem:[%s4]]
  %s6 = scalar_lea.smem %s0, 3
  %s7 = sld [smem:[%s6]]
  %s8 = scalar_lea.smem %s0, 4
  %s9 = sld [smem:[%s8]]
  %s10 = scalar_lea.smem %s0, 5
  %s11 = sld [smem:[%s10]]
  %s12 = scalar_lea.smem %s0, 6
  %s13 = sld [smem:[%s12]]
  %s14 = scalar_lea.smem %s0, 7
  %s15 = sld [smem:[%s14]]
  %s16 = scalar_lea.smem %s0, 8
  %s17 = sld [smem:[%s16]]
  %s18 = scalar_lea.smem %s0, 9
  %s19 = sld [smem:[%s18]]
  %s20 = scalar_lea.smem %s0, 10
  %s21 = sld [smem:[%s20]]
  %s22 = scalar_lea.smem %s0, 11
  %s23 = sld [smem:[%s22]]
  %s24 = scalar_lea.smem %s0, 12
  %s25 = sld [smem:[%s24]]
  %s26 = scalar_lea.smem %s0, 13
  %s27 = sld [smem:[%s26]]
  %s28 = scalar_lea.smem %s0, 14
  %s29 = sld [smem:[%s28]]
  %s30 = scalar_lea.smem %s0, 15
  %s31 = sld [smem:[%s30]]
  %s32 = scalar_lea.smem %s0, 16
  %s33 = sld [smem:[%s32]]
  %s34 = scalar_lea.smem %s0, 17
  %s35 = sld [smem:[%s34]]
  %s36 = scalar_lea.smem %s0, 18
  %s37 = sld [smem:[%s36]]
  %s38 = scalar_lea.smem %s0, 19
  %s39 = sld [smem:[%s38]]
  %s40 = scalar_lea.smem %s0, 20
  %s41 = sld [smem:[%s40]]
  %s42 = scalar_lea.smem %s0, 21
  %s43 = sld [smem:[%s42]]
  %s44 = scalar_lea.smem %s0, 22
  %s45 = sld [smem:[%s44]]
  %s46 = scalar_lea.smem %s0, 23
  %s47 = sld [smem:[%s46]]
  %s48 = scalar_lea.smem %s0, 24
  %s49 = sld [smem:[%s48]]
  %s50 = scalar_lea.smem %s0, 25
  %s51 = sld [smem:[%s50]]
  %s52 = scalar_lea.smem %s0, 26
  %s53 = sld [smem:[%s52]]
  %s54 = scalar_lea.smem %s0, 27
  %s55 = sld [smem:[%s54]]
  %s56 = scalar_lea.smem %s0, 28
  %s57 = sld [smem:[%s56]]
  %s58 = scalar_lea.smem %s0, 29
  %s59 = sld [smem:[%s58]]
  %s60 = scalar_lea.smem %s0, 30
  %s61 = sld [smem:[%s60]]
  %s62 = scalar_lea.smem %s0, 31
  %s63 = sld [smem:[%s62]]
  %s64 = scalar_lea.smem %s0, 32
  %s65 = sld [smem:[%s64]]
  %s66 = scalar_lea.smem %s0, 33
  %s67 = sld [smem:[%s66]]
  %s68 = scalar_lea.smem %s0, 34
  %s69 = sld [smem:[%s68]]
  %s70 = scalar_lea.smem %s0, 35
  %s71 = sld [smem:[%s70]]
  %s72 = scalar_lea.smem %s0, 36
  %s73 = sld [smem:[%s72]]
  %s74 = scalar_lea.smem %s0, 37
  %s75 = sld [smem:[%s74]]
  %s76 = scalar_lea.smem %s0, 38
  %s77 = sld [smem:[%s76]]
  %s78 = scalar_lea.smem %s0, 39
  %s79 = sld [smem:[%s78]]
  %s80 = scalar_lea.smem %s0, 40
  %s81 = sld [smem:[%s80]]
  %s82 = scalar_lea.smem %s0, 41
  %s83 = sld [smem:[%s82]]
  %s84 = scalar_lea.smem %s0, 42
  %s85 = sld [smem:[%s84]]
  %s86 = scalar_lea.smem %s0, 43
  %s87 = sld [smem:[%s86]]
  %s88 = scalar_lea.smem %s0, 44
  %s89 = sld [smem:[%s88]]
  %s90 = scalar_lea.smem %s0, 45
  %s91 = sld [smem:[%s90]]
  %s92 = scalar_lea.smem %s0, 46
  %s93 = sld [smem:[%s92]]
  %s94 = scalar_lea.smem %s0, 47
  %s95 = sld [smem:[%s94]]
  %s96 = scalar_lea.smem %s0, 48
  %s97 = sld [smem:[%s96]]
  %s98 = sld [smem:[#allocation0]]
  $region202: #{dnn_forward.1} parent=0
    _
  %s100 = ssub.s32 1, %s98
  %s101 = scalar_select 0, %s100, %s98
  // Predicated region
  $region2: #{dnn_forward.1} parent=0 // pred_check
    _
  $region3: #{dnn_forward.1} parent=0 // pred_check_branch
    %103 = sbr.rel (0) target = $region5
  $region4: #{dnn_forward.1} parent=0 // pred_region
    _
  $region5: #{dnn_forward.1} parent=0 // pred_fallthru
    _
  // Predicated region
  $region6: #{dnn_forward.1} parent=0 // pred_check
    _
  $region7: #{dnn_forward.1} parent=0 // pred_check_branch
    %105 = sbr.rel (0) target = $region9
  $region8: #{dnn_forward.1} parent=0 // pred_region
    _
  $region9: #{dnn_forward.1} parent=0 // pred_fallthru
    _
  // Predicated region
  $region10: #{dnn_forward.1} parent=0 // pred_check
    _
  $region11: #{dnn_forward.1} parent=0 // pred_check_branch
    %107 = sbr.rel (0) target = $region13
  $region12: #{dnn_forward.1} parent=0 // pred_region
    _
  $region13: #{dnn_forward.1} parent=0 // pred_fallthru
    _
  // Predicated region
  $region14: #{dnn_forward.1} parent=0 // pred_check
    _
  $region15: #{dnn_forward.1} parent=0 // pred_check_branch
    %109 = sbr.rel (0) target = $region17
  $region16: #{dnn_forward.1} parent=0 // pred_region
    _
  $region17: #{dnn_forward.1} parent=0 // pred_fallthru
    _
  // Predicated region
  $region18: #{dnn_forward.1} parent=0 // pred_check
    _
  $region19: #{dnn_forward.1} parent=0 // pred_check_branch
    %111 = sbr.rel (0) target = $region21
  $region20: #{dnn_forward.1} parent=0 // pred_region
    _
  $region21: #{dnn_forward.1} parent=0 // pred_fallthru
    _
  // Predicated region
  $region22: #{dnn_forward.1} parent=0 // pred_check
    _
  $region23: #{dnn_forward.1} parent=0 // pred_check_branch
    %113 = sbr.rel (0) target = $region25
  $region24: #{dnn_forward.1} parent=0 // pred_region
    _
  $region25: #{dnn_forward.1} parent=0 // pred_fallthru
    _
  // Predicated region
  $region26: #{dnn_forward.1} parent=0 // pred_check
    _
  $region27: #{dnn_forward.1} parent=0 // pred_check_branch
    %115 = sbr.rel (0) target = $region29
  $region28: #{dnn_forward.1} parent=0 // pred_region
    _
  $region29: #{dnn_forward.1} parent=0 // pred_fallthru
    _
  // Predicated region
  $region30: #{dnn_forward.1} parent=0 // pred_check
    _
  $region31: #{dnn_forward.1} parent=0 // pred_check_branch
    %117 = sbr.rel (0) target = $region33
  $region32: #{dnn_forward.1} parent=0 // pred_region
    _
  $region33: #{dnn_forward.1} parent=0 // pred_fallthru
    _
  // Predicated region
  $region34: #{dnn_forward.1} parent=0 // pred_check
    _
  $region35: #{dnn_forward.1} parent=0 // pred_check_branch
    %119 = sbr.rel (0) target = $region37
  $region36: #{dnn_forward.1} parent=0 // pred_region
    _
  $region37: #{dnn_forward.1} parent=0 // pred_fallthru
    _
  // Predicated region
  $region38: #{dnn_forward.1} parent=0 // pred_check
    _
  $region39: #{dnn_forward.1} parent=0 // pred_check_branch
    %121 = sbr.rel (0) target = $region41
  $region40: #{dnn_forward.1} parent=0 // pred_region
    _
  $region41: #{dnn_forward.1} parent=0 // pred_fallthru
    _
  // Predicated region
  $region42: #{dnn_forward.1} parent=0 // pred_check
    _
  $region43: #{dnn_forward.1} parent=0 // pred_check_branch
    %123 = sbr.rel (0) target = $region45
  $region44: #{dnn_forward.1} parent=0 // pred_region
    _
  $region45: #{dnn_forward.1} parent=0 // pred_fallthru
    _
  // Predicated region
  $region46: #{dnn_forward.1} parent=0 // pred_check
    _
  $region47: #{dnn_forward.1} parent=0 // pred_check_branch
    %125 = sbr.rel (0) target = $region49
  $region48: #{dnn_forward.1} parent=0 // pred_region
    _
  $region49: #{dnn_forward.1} parent=0 // pred_fallthru
    _
  // Predicated region
  $region50: #{dnn_forward.1} parent=0 // pred_check
    _
  $region51: #{dnn_forward.1} parent=0 // pred_check_branch
    %127 = sbr.rel (0) target = $region53
  $region52: #{dnn_forward.1} parent=0 // pred_region
    _
  $region53: #{dnn_forward.1} parent=0 // pred_fallthru
    _
  // Predicated region
  $region54: #{dnn_forward.1} parent=0 // pred_check
    _
  $region55: #{dnn_forward.1} parent=0 // pred_check_branch
    %129 = sbr.rel (0) target = $region57
  $region56: #{dnn_forward.1} parent=0 // pred_region
    _
  $region57: #{dnn_forward.1} parent=0 // pred_fallthru
    _
  // Predicated region
  $region58: #{dnn_forward.1} parent=0 // pred_check
    _
  $region59: #{dnn_forward.1} parent=0 // pred_check_branch
    %131 = sbr.rel (0) target = $region61
  $region60: #{dnn_forward.1} parent=0 // pred_region
    _
  $region61: #{dnn_forward.1} parent=0 // pred_fallthru
    _
  // Predicated region
  $region62: #{dnn_forward.1} parent=0 // pred_check
    _
  $region63: #{dnn_forward.1} parent=0 // pred_check_branch
    %133 = sbr.rel (0) target = $region65
  $region64: #{dnn_forward.1} parent=0 // pred_region
    _
  $region65: #{dnn_forward.1} parent=0 // pred_fallthru
    _
  // Predicated region
  $region66: #{dnn_forward.1} parent=0 // pred_check
    _
  $region67: #{dnn_forward.1} parent=0 // pred_check_branch
    %135 = sbr.rel (0) target = $region69
  $region68: #{dnn_forward.1} parent=0 // pred_region
    _
  $region69: #{dnn_forward.1} parent=0 // pred_fallthru
    _
  // Predicated region
  $region70: #{dnn_forward.1} parent=0 // pred_check
    _
  $region71: #{dnn_forward.1} parent=0 // pred_check_branch
    %137 = sbr.rel (0) target = $region73
  $region72: #{dnn_forward.1} parent=0 // pred_region
    _
  $region73: #{dnn_forward.1} parent=0 // pred_fallthru
    _
  // Predicated region
  $region74: #{dnn_forward.1} parent=0 // pred_check
    _
  $region75: #{dnn_forward.1} parent=0 // pred_check_branch
    %139 = sbr.rel (0) target = $region77
  $region76: #{dnn_forward.1} parent=0 // pred_region
    _
  $region77: #{dnn_forward.1} parent=0 // pred_fallthru
    _
  // Predicated region
  $region78: #{dnn_forward.1} parent=0 // pred_check
    _
  $region79: #{dnn_forward.1} parent=0 // pred_check_branch
    %141 = sbr.rel (0) target = $region81
  $region80: #{dnn_forward.1} parent=0 // pred_region
    _
  $region81: #{dnn_forward.1} parent=0 // pred_fallthru
    _
  // Predicated region
  $region82: #{dnn_forward.1} parent=0 // pred_check
    _
  $region83: #{dnn_forward.1} parent=0 // pred_check_branch
    %143 = sbr.rel (0) target = $region85
  $region84: #{dnn_forward.1} parent=0 // pred_region
    _
  $region85: #{dnn_forward.1} parent=0 // pred_fallthru
    _
  // Predicated region
  $region86: #{dnn_forward.1} parent=0 // pred_check
    _
  $region87: #{dnn_forward.1} parent=0 // pred_check_branch
    %145 = sbr.rel (0) target = $region89
  $region88: #{dnn_forward.1} parent=0 // pred_region
    _
  $region89: #{dnn_forward.1} parent=0 // pred_fallthru
    _
  // Predicated region
  $region90: #{dnn_forward.1} parent=0 // pred_check
    _
  $region91: #{dnn_forward.1} parent=0 // pred_check_branch
    %147 = sbr.rel (0) target = $region93
  $region92: #{dnn_forward.1} parent=0 // pred_region
    _
  $region93: #{dnn_forward.1} parent=0 // pred_fallthru
    _
  // Predicated region
  $region94: #{dnn_forward.1} parent=0 // pred_check
    _
  $region95: #{dnn_forward.1} parent=0 // pred_check_branch
    %149 = sbr.rel (0) target = $region97
  $region96: #{dnn_forward.1} parent=0 // pred_region
    _
  $region97: #{dnn_forward.1} parent=0 // pred_fallthru
    _
  // Predicated region
  $region98: #{dnn_forward.1} parent=0 // pred_check
    _
  $region99: #{dnn_forward.1} parent=0 // pred_check_branch
    %151 = sbr.rel (0) target = $region101
  $region100: #{dnn_forward.1} parent=0 // pred_region
    _
  $region101: #{dnn_forward.1} parent=0 // pred_fallthru
    _
  // Predicated region
  $region102: #{dnn_forward.1} parent=0 // pred_check
    _
  $region103: #{dnn_forward.1} parent=0 // pred_check_branch
    %153 = sbr.rel (0) target = $region105
  $region104: #{dnn_forward.1} parent=0 // pred_region
    _
  $region105: #{dnn_forward.1} parent=0 // pred_fallthru
    _
  // Predicated region
  $region106: #{dnn_forward.1} parent=0 // pred_check
    _
  $region107: #{dnn_forward.1} parent=0 // pred_check_branch
    %155 = sbr.rel (0) target = $region109
  $region108: #{dnn_forward.1} parent=0 // pred_region
    _
  $region109: #{dnn_forward.1} parent=0 // pred_fallthru
    _
  // Predicated region
  $region110: #{dnn_forward.1} parent=0 // pred_check
    _
  $region111: #{dnn_forward.1} parent=0 // pred_check_branch
    %157 = sbr.rel (0) target = $region113
  $region112: #{dnn_forward.1} parent=0 // pred_region
    _
  $region113: #{dnn_forward.1} parent=0 // pred_fallthru
    _
  // Predicated region
  $region114: #{dnn_forward.1} parent=0 // pred_check
    _
  $region115: #{dnn_forward.1} parent=0 // pred_check_branch
    %159 = sbr.rel (0) target = $region117
  $region116: #{dnn_forward.1} parent=0 // pred_region
    _
  $region117: #{dnn_forward.1} parent=0 // pred_fallthru
    _
  // Predicated region
  $region118: #{dnn_forward.1} parent=0 // pred_check
    _
  $region119: #{dnn_forward.1} parent=0 // pred_check_branch
    %161 = sbr.rel (0) target = $region121
  $region120: #{dnn_forward.1} parent=0 // pred_region
    _
  $region121: #{dnn_forward.1} parent=0 // pred_fallthru
    _
  // Predicated region
  $region122: #{dnn_forward.1} parent=0 // pred_check
    _
  $region123: #{dnn_forward.1} parent=0 // pred_check_branch
    %163 = sbr.rel (0) target = $region125
  $region124: #{dnn_forward.1} parent=0 // pred_region
    _
  $region125: #{dnn_forward.1} parent=0 // pred_fallthru
    _
  // Predicated region
  $region126: #{dnn_forward.1} parent=0 // pred_check
    _
  $region127: #{dnn_forward.1} parent=0 // pred_check_branch
    %165 = sbr.rel (0) target = $region129
  $region128: #{dnn_forward.1} parent=0 // pred_region
    _
  $region129: #{dnn_forward.1} parent=0 // pred_fallthru
    _
  // Predicated region
  $region130: #{dnn_forward.1} parent=0 // pred_check
    _
  $region131: #{dnn_forward.1} parent=0 // pred_check_branch
    %167 = sbr.rel (0) target = $region133
  $region132: #{dnn_forward.1} parent=0 // pred_region
    _
  $region133: #{dnn_forward.1} parent=0 // pred_fallthru
    _
  // Predicated region
  $region134: #{dnn_forward.1} parent=0 // pred_check
    _
  $region135: #{dnn_forward.1} parent=0 // pred_check_branch
    %169 = sbr.rel (0) target = $region137
  $region136: #{dnn_forward.1} parent=0 // pred_region
    _
  $region137: #{dnn_forward.1} parent=0 // pred_fallthru
    _
  // Predicated region
  $region138: #{dnn_forward.1} parent=0 // pred_check
    _
  $region139: #{dnn_forward.1} parent=0 // pred_check_branch
    %171 = sbr.rel (0) target = $region141
  $region140: #{dnn_forward.1} parent=0 // pred_region
    _
  $region141: #{dnn_forward.1} parent=0 // pred_fallthru
    _
  // Predicated region
  $region142: #{dnn_forward.1} parent=0 // pred_check
    _
  $region143: #{dnn_forward.1} parent=0 // pred_check_branch
    %173 = sbr.rel (0) target = $region145
  $region144: #{dnn_forward.1} parent=0 // pred_region
    _
  $region145: #{dnn_forward.1} parent=0 // pred_fallthru
    _
  // Predicated region
  $region146: #{dnn_forward.1} parent=0 // pred_check
    _
  $region147: #{dnn_forward.1} parent=0 // pred_check_branch
    %175 = sbr.rel (0) target = $region149
  $region148: #{dnn_forward.1} parent=0 // pred_region
    _
  $region149: #{dnn_forward.1} parent=0 // pred_fallthru
    _
  // Predicated region
  $region150: #{dnn_forward.1} parent=0 // pred_check
    _
  $region151: #{dnn_forward.1} parent=0 // pred_check_branch
    %177 = sbr.rel (0) target = $region153
  $region152: #{dnn_forward.1} parent=0 // pred_region
    _
  $region153: #{dnn_forward.1} parent=0 // pred_fallthru
    _
  // Predicated region
  $region154: #{dnn_forward.1} parent=0 // pred_check
    _
  $region155: #{dnn_forward.1} parent=0 // pred_check_branch
    %179 = sbr.rel (0) target = $region157
  $region156: #{dnn_forward.1} parent=0 // pred_region
    _
  $region157: #{dnn_forward.1} parent=0 // pred_fallthru
    _
  // Predicated region
  $region158: #{dnn_forward.1} parent=0 // pred_check
    _
  $region159: #{dnn_forward.1} parent=0 // pred_check_branch
    %181 = sbr.rel (0) target = $region161
  $region160: #{dnn_forward.1} parent=0 // pred_region
    _
  $region161: #{dnn_forward.1} parent=0 // pred_fallthru
    _
  // Predicated region
  $region162: #{dnn_forward.1} parent=0 // pred_check
    _
  $region163: #{dnn_forward.1} parent=0 // pred_check_branch
    %183 = sbr.rel (0) target = $region165
  $region164: #{dnn_forward.1} parent=0 // pred_region
    _
  $region165: #{dnn_forward.1} parent=0 // pred_fallthru
    _
  // Predicated region
  $region166: #{dnn_forward.1} parent=0 // pred_check
    _
  $region167: #{dnn_forward.1} parent=0 // pred_check_branch
    %185 = sbr.rel (0) target = $region169
  $region168: #{dnn_forward.1} parent=0 // pred_region
    _
  $region169: #{dnn_forward.1} parent=0 // pred_fallthru
    _
  // Predicated region
  $region170: #{dnn_forward.1} parent=0 // pred_check
    _
  $region171: #{dnn_forward.1} parent=0 // pred_check_branch
    %187 = sbr.rel (0) target = $region173
  $region172: #{dnn_forward.1} parent=0 // pred_region
    _
  $region173: #{dnn_forward.1} parent=0 // pred_fallthru
    _
  // Predicated region
  $region174: #{dnn_forward.1} parent=0 // pred_check
    _
  $region175: #{dnn_forward.1} parent=0 // pred_check_branch
    %189 = sbr.rel (0) target = $region177
  $region176: #{dnn_forward.1} parent=0 // pred_region
    _
  $region177: #{dnn_forward.1} parent=0 // pred_fallthru
    _
  // Predicated region
  $region178: #{dnn_forward.1} parent=0 // pred_check
    _
  $region179: #{dnn_forward.1} parent=0 // pred_check_branch
    %191 = sbr.rel (0) target = $region181
  $region180: #{dnn_forward.1} parent=0 // pred_region
    _
  $region181: #{dnn_forward.1} parent=0 // pred_fallthru
    _
  // Predicated region
  $region182: #{dnn_forward.1} parent=0 // pred_check
    _
  $region183: #{dnn_forward.1} parent=0 // pred_check_branch
    %193 = sbr.rel (0) target = $region185
  $region184: #{dnn_forward.1} parent=0 // pred_region
    _
  $region185: #{dnn_forward.1} parent=0 // pred_fallthru
    _
  // Predicated region
  $region186: #{dnn_forward.1} parent=0 // pred_check
    _
  $region187: #{dnn_forward.1} parent=0 // pred_check_branch
    %195 = sbr.rel (0) target = $region189
  $region188: #{dnn_forward.1} parent=0 // pred_region
    _
  $region189: #{dnn_forward.1} parent=0 // pred_fallthru
    _
  // Predicated region
  $region190: #{dnn_forward.1} parent=0 // pred_check
    _
  $region191: #{dnn_forward.1} parent=0 // pred_check_branch
    %197 = sbr.rel (0) target = $region193
  $region192: #{dnn_forward.1} parent=0 // pred_region
    _
  $region193: #{dnn_forward.1} parent=0 // pred_fallthru
    _
  %v199 = vld [vmem:[%s7] sm:$0x1]
  %v200 = vld [vmem:[%s9] sm:$0x1]
  %v201 = vld [vmem:[%s1] sm:$0x7]
  %v202 = vld [vmem:[%s3] sm:$0x7]
  %203 = vrot.lane.b32.xlu0 %v202, 1
  %v204 = vpop.permute.xlu0 %203
  %v206 = vlaneseq
  %v207 = vshrl.u32 %v206, 7
  %v208 = vsub.s32 0, %v207
  %v209 = vrot.slane %v199, %v208
  %v211 = vmul.f32 %v204, %v209
  %v213 = vrot.slane %v201, 5
  %v216 = vrot.slane %v202, 2
  %vm218 = vcmask 1042432
  %v219 = vsel %vm218, %v211, %v213
  %vm220 = vcmask 1045504
  %v221 = vsel %vm220, %v219, %v216
  %v222 = vpack.c.bf16 %v216, %v221
  %223 = vrot.lane.b32.xlu0 %v201, 127
  %v224 = vpop.permute.xlu0 %223
  %v226 = vlaneseq
  %v227 = vshrl.u32 %v226, 7
  %v228 = vsub.s32 0, %v227
  %v229 = vrot.slane %v200, %v228
  %v231 = vmul.f32 %v224, %v229
  %v232 = vrot.slane %v202, 5
  %v235 = vrot.slane %v231, 2
  %v237 = vsel %vm218, %v201, %v232
  %v238 = vsel %vm220, %v237, %v235
  %v239 = vpack.c.bf16 %v235, %v238
  %v240 = vld [vmem:[%s15] sm:$0x7]
  %v241 = vld [vmem:[%s17] sm:$0x7]
  %v242 = vld [vmem:[%s13] sm:$0x3]
  %vm243 = vcmask 72704
  %v245 = vsel %vm243, %v242, 0
  %vm247 = vcmask 1043456
  %vm248 = vcmask 1044480
  %v249 = vsel %vm247, 4294967295, 65535
  %v250 = vsel %vm248, %v249, 0
  %v252 = vand.u32 %v222, %v250
  %254 = vmatprep.subr.bf16.mxu0 0
  %255 = vmatpush1.bf16.msra.mxu0 %v252
  %256 = vmatprep.subr.bf16.mxu0 0
  %257 = vmatpush1.bf16.msra.mxu0 0
  %258 = vmatprep.subr.bf16.mxu0 0
  %259 = vmatpush1.bf16.msra.mxu0 0
  %260 = vmatprep.subr.bf16.mxu0 0
  %261 = vmatpush1.bf16.msra.mxu0 0
  %262 = vmatprep.subr.bf16.mxu0 0
  %263 = vmatpush1.bf16.msra.mxu0 0
  %264 = vmatprep.subr.bf16.mxu0 0
  %265 = vmatpush1.bf16.msra.mxu0 0
  %266 = vmatprep.subr.bf16.mxu0 0
  %267 = vmatpush1.bf16.msra.mxu0 0
  %268 = vmatprep.subr.bf16.mxu0 0
  %269 = vmatpush1.bf16.msra.mxu0 0
  %270 = vmatprep.subr.bf16.mxu0 0
  %271 = vmatpush1.bf16.msra.mxu0 0
  %272 = vmatprep.subr.bf16.mxu0 0
  %273 = vmatpush1.bf16.msra.mxu0 0
  %274 = vmatprep.subr.bf16.mxu0 0
  %275 = vmatpush1.bf16.msra.mxu0 0
  %276 = vmatprep.subr.bf16.mxu0 0
  %277 = vmatpush1.bf16.msra.mxu0 0
  %278 = vmatprep.subr.bf16.mxu0 0
  %279 = vmatpush1.bf16.msra.mxu0 0
  %280 = vmatprep.subr.bf16.mxu0 0
  %281 = vmatpush1.bf16.msra.mxu0 0
  %282 = vmatprep.subr.bf16.mxu0 0
  %283 = vmatpush1.bf16.msra.mxu0 0
  %284 = vmatprep.subr.bf16.mxu0 0
  %285 = vmatpush1.bf16.msra.mxu0 0
  %286 = vmatprep.mubr.bf16.mxu0 0
  %287 = vmatmul.mubr.bf16.gmra.mrb[0].mxu0 %v245
  %v288 = vpop.f32.mrb[0].mxu0
  %v289 = vadd.f32 0.0, %v288
  %v290 = vpop.f32.mrb[0].mxu0
  %v291 = vpop.f32.mrb[0].mxu0
  %v292 = vpop.f32.mrb[0].mxu0
  %293 = vdwg.mxu0
  %295 = vset.pattern.permute.xlu0 0
  %296 = vperm.xlu0 %295, %v240
  %v297 = vpop.permute.xlu0 %296
  %v299 = vmul.f32 %v289, %v297
  %301 = vset.pattern.permute.xlu0 0
  %302 = vperm.xlu0 %301, %v241
  %v303 = vpop.permute.xlu0 %302
  %v305 = vadd.f32 %v299, %v303
  %v307 = vand.u32 %v239, %v250
  %309 = vmatprep.subr.bf16.mxu0 0
  %310 = vmatpush1.bf16.msra.mxu0 %v307
  %311 = vmatprep.subr.bf16.mxu0 0
  %312 = vmatpush1.bf16.msra.mxu0 0
  %313 = vmatprep.subr.bf16.mxu0 0
  %314 = vmatpush1.bf16.msra.mxu0 0
  %315 = vmatprep.subr.bf16.mxu0 0
  %316 = vmatpush1.bf16.msra.mxu0 0
  %317 = vmatprep.subr.bf16.mxu0 0
  %318 = vmatpush1.bf16.msra.mxu0 0
  %319 = vmatprep.subr.bf16.mxu0 0
  %320 = vmatpush1.bf16.msra.mxu0 0
  %321 = vmatprep.subr.bf16.mxu0 0
  %322 = vmatpush1.bf16.msra.mxu0 0
  %323 = vmatprep.subr.bf16.mxu0 0
  %324 = vmatpush1.bf16.msra.mxu0 0
  %325 = vmatprep.subr.bf16.mxu0 0
  %326 = vmatpush1.bf16.msra.mxu0 0
  %327 = vmatprep.subr.bf16.mxu0 0
  %328 = vmatpush1.bf16.msra.mxu0 0
  %329 = vmatprep.subr.bf16.mxu0 0
  %330 = vmatpush1.bf16.msra.mxu0 0
  %331 = vmatprep.subr.bf16.mxu0 0
  %332 = vmatpush1.bf16.msra.mxu0 0
  %333 = vmatprep.subr.bf16.mxu0 0
  %334 = vmatpush1.bf16.msra.mxu0 0
  %335 = vmatprep.subr.bf16.mxu0 0
  %336 = vmatpush1.bf16.msra.mxu0 0
  %337 = vmatprep.subr.bf16.mxu0 0
  %338 = vmatpush1.bf16.msra.mxu0 0
  %339 = vmatprep.subr.bf16.mxu0 0
  %340 = vmatpush1.bf16.msra.mxu0 0
  %341 = vmatprep.mubr.bf16.mxu0 0
  %342 = vmatmul.mubr.bf16.gmra.mrb[0].mxu0 %v245
  %v343 = vpop.f32.mrb[0].mxu0
  %v344 = vadd.f32 0.0, %v343
  %v345 = vpop.f32.mrb[0].mxu0
  %v346 = vpop.f32.mrb[0].mxu0
  %v347 = vpop.f32.mrb[0].mxu0
  %348 = vdwg.mxu0
  %v349 = vmul.f32 %v344, %v297
  %v350 = vadd.f32 %v349, %v303
  %v351 = vmax.f32 %v305, %v350
  %v352 = vmax.f32 %v351, 0.0
  %v353 = vpack.c.bf16 %v352, %v352
  %v354 = vld [vmem:[%s37] sm:$0xf]
  %v355 = vld [vmem:[%s37 + $0x4] sm:$0xf]
  %v358 = vunpack.c.l.b16 %v354
  %v359 = vunpack.c.l.b16 %v355
  %v360 = vpack.c.b16 %v359, %v358
  %vm361 = vcmask 23552
  %v363 = vsel %vm361, %v360, 0
  %vm365 = vcmask 1040384
  %vm366 = vcmask 1041408
  %v367 = vsel %vm365, 4294967295, 65535
  %v368 = vsel %vm366, %v367, 0
  %v370 = vand.u32 %v353, %v368
  %372 = vmatprep.subr.bf16.mxu0 0
  %373 = vmatpush1.bf16.msra.mxu0 %v370
  %374 = vmatprep.subr.bf16.mxu0 0
  %375 = vmatpush1.bf16.msra.mxu0 0
  %376 = vmatprep.subr.bf16.mxu0 0
  %377 = vmatpush1.bf16.msra.mxu0 0
  %378 = vmatprep.subr.bf16.mxu0 0
  %379 = vmatpush1.bf16.msra.mxu0 0
  %380 = vmatprep.subr.bf16.mxu0 0
  %381 = vmatpush1.bf16.msra.mxu0 0
  %382 = vmatprep.subr.bf16.mxu0 0
  %383 = vmatpush1.bf16.msra.mxu0 0
  %384 = vmatprep.subr.bf16.mxu0 0
  %385 = vmatpush1.bf16.msra.mxu0 0
  %386 = vmatprep.subr.bf16.mxu0 0
  %387 = vmatpush1.bf16.msra.mxu0 0
  %388 = vmatprep.subr.bf16.mxu0 0
  %389 = vmatpush1.bf16.msra.mxu0 0
  %390 = vmatprep.subr.bf16.mxu0 0
  %391 = vmatpush1.bf16.msra.mxu0 0
  %392 = vmatprep.subr.bf16.mxu0 0
  %393 = vmatpush1.bf16.msra.mxu0 0
  %394 = vmatprep.subr.bf16.mxu0 0
  %395 = vmatpush1.bf16.msra.mxu0 0
  %396 = vmatprep.subr.bf16.mxu0 0
  %397 = vmatpush1.bf16.msra.mxu0 0
  %398 = vmatprep.subr.bf16.mxu0 0
  %399 = vmatpush1.bf16.msra.mxu0 0
  %400 = vmatprep.subr.bf16.mxu0 0
  %401 = vmatpush1.bf16.msra.mxu0 0
  %402 = vmatprep.subr.bf16.mxu0 0
  %403 = vmatpush1.bf16.msra.mxu0 0
  %404 = vmatprep.mubr.bf16.mxu0 0
  %405 = vmatmul.mubr.bf16.gmra.mrb[0].mxu0 %v363
  %v406 = vpop.f32.mrb[0].mxu0
  %v407 = vadd.f32 0.0, %v406
  %v408 = vpop.f32.mrb[0].mxu0
  %v409 = vpop.f32.mrb[0].mxu0
  %v410 = vadd.f32 0.0, %v409
  %v411 = vpop.f32.mrb[0].mxu0
  %412 = vdwg.mxu0
  %v413 = vld [vmem:[%s39] sm:$0xff]
  %v414 = vld [vmem:[%s39 + $0x8] sm:$0xff]
  %416 = vset.pattern.permute.xlu0 0
  %417 = vperm.xlu0 %416, %v413
  %v418 = vpop.permute.xlu0 %417
  %421 = vset.pattern.permute.xlu0 0
  %422 = vperm.xlu0 %421, %v414
  %v423 = vpop.permute.xlu0 %422
  %v425 = vmul.f32 %v407, %v418
  %v426 = vmul.f32 %v410, %v423
  %v427 = vld [vmem:[%s41] sm:$0xff]
  %v428 = vld [vmem:[%s41 + $0x8] sm:$0xff]
  %430 = vset.pattern.permute.xlu0 0
  %431 = vperm.xlu0 %430, %v427
  %v432 = vpop.permute.xlu0 %431
  %435 = vset.pattern.permute.xlu0 0
  %436 = vperm.xlu0 %435, %v428
  %v437 = vpop.permute.xlu0 %436
  %v439 = vadd.f32 %v425, %v432
  %v440 = vadd.f32 %v426, %v437
  %441 = vrot.lane.b32.xlu0 %v352, 1
  %v442 = vpop.permute.xlu0 %441
  %v443 = vmul.f32 %v442, %v209
  %444 = vrot.lane.b32.xlu0 %v352, 127
  %v445 = vpop.permute.xlu0 %444
  %v446 = vmul.f32 %v445, %v229
  %v448 = vrot.slane %v352, 5
  %v451 = vrot.slane %v446, 2
  %v453 = vsel %vm218, %v443, %v448
  %v454 = vsel %vm220, %v453, %v451
  %v455 = vpack.c.bf16 %v451, %v454
  %v456 = vld [vmem:[%s19] sm:$0xf]
  %v457 = vld [vmem:[%s19 + $0x4] sm:$0xf]
  %v460 = vunpack.c.l.b16 %v456
  %v461 = vunpack.c.l.b16 %v457
  %v462 = vpack.c.b16 %v461, %v460
  %v464 = vsel %vm243, %v462, 0
  %v467 = vand.u32 %v455, %v250
  %469 = vmatprep.subr.bf16.mxu0 0
  %470 = vmatpush1.bf16.msra.mxu0 %v467
  %471 = vmatprep.subr.bf16.mxu0 0
  %472 = vmatpush1.bf16.msra.mxu0 0
  %473 = vmatprep.subr.bf16.mxu0 0
  %474 = vmatpush1.bf16.msra.mxu0 0
  %475 = vmatprep.subr.bf16.mxu0 0
  %476 = vmatpush1.bf16.msra.mxu0 0
  %477 = vmatprep.subr.bf16.mxu0 0
  %478 = vmatpush1.bf16.msra.mxu0 0
  %479 = vmatprep.subr.bf16.mxu0 0
  %480 = vmatpush1.bf16.msra.mxu0 0
  %481 = vmatprep.subr.bf16.mxu0 0
  %482 = vmatpush1.bf16.msra.mxu0 0
  %483 = vmatprep.subr.bf16.mxu0 0
  %484 = vmatpush1.bf16.msra.mxu0 0
  %485 = vmatprep.subr.bf16.mxu0 0
  %486 = vmatpush1.bf16.msra.mxu0 0
  %487 = vmatprep.subr.bf16.mxu0 0
  %488 = vmatpush1.bf16.msra.mxu0 0
  %489 = vmatprep.subr.bf16.mxu0 0
  %490 = vmatpush1.bf16.msra.mxu0 0
  %491 = vmatprep.subr.bf16.mxu0 0
  %492 = vmatpush1.bf16.msra.mxu0 0
  %493 = vmatprep.subr.bf16.mxu0 0
  %494 = vmatpush1.bf16.msra.mxu0 0
  %495 = vmatprep.subr.bf16.mxu0 0
  %496 = vmatpush1.bf16.msra.mxu0 0
  %497 = vmatprep.subr.bf16.mxu0 0
  %498 = vmatpush1.bf16.msra.mxu0 0
  %499 = vmatprep.subr.bf16.mxu0 0
  %500 = vmatpush1.bf16.msra.mxu0 0
  %501 = vmatprep.mubr.bf16.mxu0 0
  %502 = vmatmul.mubr.bf16.gmra.mrb[0].mxu0 %v464
  %v503 = vpop.f32.mrb[0].mxu0
  %v504 = vadd.f32 0.0, %v503
  %v505 = vpop.f32.mrb[0].mxu0
  %v506 = vpop.f32.mrb[0].mxu0
  %v507 = vadd.f32 0.0, %v506
  %v508 = vpop.f32.mrb[0].mxu0
  %509 = vdwg.mxu0
  %v510 = vld [vmem:[%s21] sm:$0xff]
  %v511 = vld [vmem:[%s21 + $0x8] sm:$0xff]
  %513 = vset.pattern.permute.xlu0 0
  %514 = vperm.xlu0 %513, %v510
  %v515 = vpop.permute.xlu0 %514
  %518 = vset.pattern.permute.xlu0 0
  %519 = vperm.xlu0 %518, %v511
  %v520 = vpop.permute.xlu0 %519
  %v522 = vmul.f32 %v504, %v515
  %v523 = vmul.f32 %v507, %v520
  %v524 = vld [vmem:[%s23] sm:$0xff]
  %v525 = vld [vmem:[%s23 + $0x8] sm:$0xff]
  %527 = vset.pattern.permute.xlu0 0
  %528 = vperm.xlu0 %527, %v524
  %v529 = vpop.permute.xlu0 %528
  %532 = vset.pattern.permute.xlu0 0
  %533 = vperm.xlu0 %532, %v525
  %v534 = vpop.permute.xlu0 %533
  %v536 = vadd.f32 %v522, %v529
  %v537 = vadd.f32 %v523, %v534
  %v538 = vmax.f32 %v536, 0.0
  %v539 = vmax.f32 %v537, 0.0
  %540 = vrot.lane.b32.xlu0 %v538, 1
  %v541 = vpop.permute.xlu0 %540
  %542 = vrot.lane.b32.xlu0 %v539, 1
  %v543 = vpop.permute.xlu0 %542
  %v544 = vmul.f32 %v541, %v209
  %v545 = vmul.f32 %v543, %v209
  %546 = vrot.lane.b32.xlu0 %v538, 127
  %v547 = vpop.permute.xlu0 %546
  %548 = vrot.lane.b32.xlu0 %v539, 127
  %v549 = vpop.permute.xlu0 %548
  %v550 = vmul.f32 %v547, %v229
  %v551 = vmul.f32 %v549, %v229
  %v552 = vpack.c.bf16 %v545, %v544
  %v553 = vpack.c.bf16 %v539, %v538
  %v554 = vpack.c.bf16 %v551, %v550
  %v555 = vld [vmem:[%s25] sm:$0x3]
  %vm556 = vcmask 392192
  %v558 = vsel %vm556, %v555, 0
  %560 = vmatprep.subr.bf16.mxu0 0
  %561 = vmatpush1.bf16.msra.mxu0 %v552
  %562 = vmatprep.subr.bf16.mxu0 0
  %563 = vmatpush1.bf16.msra.mxu0 %v553
  %564 = vmatprep.subr.bf16.mxu0 0
  %565 = vmatpush1.bf16.msra.mxu0 %v554
  %566 = vmatprep.subr.bf16.mxu0 0
  %567 = vmatpush1.bf16.msra.mxu0 0
  %568 = vmatprep.subr.bf16.mxu0 0
  %569 = vmatpush1.bf16.msra.mxu0 0
  %570 = vmatprep.subr.bf16.mxu0 0
  %571 = vmatpush1.bf16.msra.mxu0 0
  %572 = vmatprep.subr.bf16.mxu0 0
  %573 = vmatpush1.bf16.msra.mxu0 0
  %574 = vmatprep.subr.bf16.mxu0 0
  %575 = vmatpush1.bf16.msra.mxu0 0
  %576 = vmatprep.subr.bf16.mxu0 0
  %577 = vmatpush1.bf16.msra.mxu0 0
  %578 = vmatprep.subr.bf16.mxu0 0
  %579 = vmatpush1.bf16.msra.mxu0 0
  %580 = vmatprep.subr.bf16.mxu0 0
  %581 = vmatpush1.bf16.msra.mxu0 0
  %582 = vmatprep.subr.bf16.mxu0 0
  %583 = vmatpush1.bf16.msra.mxu0 0
  %584 = vmatprep.subr.bf16.mxu0 0
  %585 = vmatpush1.bf16.msra.mxu0 0
  %586 = vmatprep.subr.bf16.mxu0 0
  %587 = vmatpush1.bf16.msra.mxu0 0
  %588 = vmatprep.subr.bf16.mxu0 0
  %589 = vmatpush1.bf16.msra.mxu0 0
  %590 = vmatprep.subr.bf16.mxu0 0
  %591 = vmatpush1.bf16.msra.mxu0 0
  %592 = vmatprep.mubr.bf16.mxu0 0
  %593 = vmatmul.mubr.bf16.gmra.mrb[0].mxu0 %v558
  %v594 = vpop.f32.mrb[0].mxu0
  %v595 = vadd.f32 0.0, %v594
  %v596 = vpop.f32.mrb[0].mxu0
  %v597 = vpop.f32.mrb[0].mxu0
  %v598 = vpop.f32.mrb[0].mxu0
  %599 = vdwg.mxu0
  %v600 = vld [vmem:[%s27] sm:$0x7]
  %602 = vset.pattern.permute.xlu0 0
  %603 = vperm.xlu0 %602, %v600
  %v604 = vpop.permute.xlu0 %603
  %v606 = vmul.f32 %v595, %v604
  %v607 = vld [vmem:[%s29] sm:$0x7]
  %609 = vset.pattern.permute.xlu0 0
  %610 = vperm.xlu0 %609, %v607
  %v611 = vpop.permute.xlu0 %610
  %v613 = vadd.f32 %v606, %v611
  %v614 = vmax.f32 %v613, 0.0
  %615 = vrot.lane.b32.xlu0 %v614, 1
  %v616 = vpop.permute.xlu0 %615
  %v617 = vmul.f32 %v616, %v209
  %618 = vrot.lane.b32.xlu0 %v614, 127
  %v619 = vpop.permute.xlu0 %618
  %v620 = vmul.f32 %v619, %v229
  %v622 = vrot.slane %v614, 5
  %v625 = vrot.slane %v620, 2
  %v627 = vsel %vm218, %v617, %v622
  %v628 = vsel %vm220, %v627, %v625
  %v629 = vpack.c.bf16 %v625, %v628
  %v630 = vld [vmem:[%s31] sm:$0xf]
  %v631 = vld [vmem:[%s31 + $0x4] sm:$0xf]
  %v634 = vunpack.c.l.b16 %v630
  %v635 = vunpack.c.l.b16 %v631
  %v636 = vpack.c.b16 %v635, %v634
  %v638 = vsel %vm243, %v636, 0
  %v641 = vand.u32 %v629, %v250
  %643 = vmatprep.subr.bf16.mxu0 0
  %644 = vmatpush1.bf16.msra.mxu0 %v641
  %645 = vmatprep.subr.bf16.mxu0 0
  %646 = vmatpush1.bf16.msra.mxu0 0
  %647 = vmatprep.subr.bf16.mxu0 0
  %648 = vmatpush1.bf16.msra.mxu0 0
  %649 = vmatprep.subr.bf16.mxu0 0
  %650 = vmatpush1.bf16.msra.mxu0 0
  %651 = vmatprep.subr.bf16.mxu0 0
  %652 = vmatpush1.bf16.msra.mxu0 0
  %653 = vmatprep.subr.bf16.mxu0 0
  %654 = vmatpush1.bf16.msra.mxu0 0
  %655 = vmatprep.subr.bf16.mxu0 0
  %656 = vmatpush1.bf16.msra.mxu0 0
  %657 = vmatprep.subr.bf16.mxu0 0
  %658 = vmatpush1.bf16.msra.mxu0 0
  %659 = vmatprep.subr.bf16.mxu0 0
  %660 = vmatpush1.bf16.msra.mxu0 0
  %661 = vmatprep.subr.bf16.mxu0 0
  %662 = vmatpush1.bf16.msra.mxu0 0
  %663 = vmatprep.subr.bf16.mxu0 0
  %664 = vmatpush1.bf16.msra.mxu0 0
  %665 = vmatprep.subr.bf16.mxu0 0
  %666 = vmatpush1.bf16.msra.mxu0 0
  %667 = vmatprep.subr.bf16.mxu0 0
  %668 = vmatpush1.bf16.msra.mxu0 0
  %669 = vmatprep.subr.bf16.mxu0 0
  %670 = vmatpush1.bf16.msra.mxu0 0
  %671 = vmatprep.subr.bf16.mxu0 0
  %672 = vmatpush1.bf16.msra.mxu0 0
  %673 = vmatprep.subr.bf16.mxu0 0
  %674 = vmatpush1.bf16.msra.mxu0 0
  %675 = vmatprep.mubr.bf16.mxu0 0
  %676 = vmatmul.mubr.bf16.gmra.mrb[0].mxu0 %v638
  %v677 = vpop.f32.mrb[0].mxu0
  %v678 = vadd.f32 0.0, %v677
  %v679 = vpop.f32.mrb[0].mxu0
  %v680 = vpop.f32.mrb[0].mxu0
  %v681 = vadd.f32 0.0, %v680
  %v682 = vpop.f32.mrb[0].mxu0
  %683 = vdwg.mxu0
  %v684 = vld [vmem:[%s33] sm:$0xff]
  %v685 = vld [vmem:[%s33 + $0x8] sm:$0xff]
  %687 = vset.pattern.permute.xlu0 0
  %688 = vperm.xlu0 %687, %v684
  %v689 = vpop.permute.xlu0 %688
  %692 = vset.pattern.permute.xlu0 0
  %693 = vperm.xlu0 %692, %v685
  %v694 = vpop.permute.xlu0 %693
  %v696 = vmul.f32 %v678, %v689
  %v697 = vmul.f32 %v681, %v694
  %v698 = vld [vmem:[%s35] sm:$0xff]
  %v699 = vld [vmem:[%s35 + $0x8] sm:$0xff]
  %701 = vset.pattern.permute.xlu0 0
  %702 = vperm.xlu0 %701, %v698
  %v703 = vpop.permute.xlu0 %702
  %706 = vset.pattern.permute.xlu0 0
  %707 = vperm.xlu0 %706, %v699
  %v708 = vpop.permute.xlu0 %707
  %v710 = vadd.f32 %v696, %v703
  %v711 = vadd.f32 %v697, %v708
  %v712 = vadd.f32 %v710, %v439
  %v713 = vadd.f32 %v711, %v440
  %v714 = vmax.f32 %v712, 0.0
  %v715 = vmax.f32 %v713, 0.0
  %v716 = vpack.c.bf16 %v715, %v714
  %v717 = vld [vmem:[%s61] sm:$0xf]
  %v718 = vld [vmem:[%s61 + $0x4] sm:$0xf]
  %v719 = vld [vmem:[%s61 + $0x8] sm:$0xf]
  %v720 = vld [vmem:[%s61 + $0xc] sm:$0xf]
  %v725 = vunpack.c.l.b16 %v717
  %v726 = vunpack.c.l.b16 %v718
  %v727 = vunpack.c.l.b16 %v719
  %v728 = vunpack.c.l.b16 %v720
  %v729 = vpack.c.b16 %v726, %v725
  %v730 = vpack.c.b16 %v728, %v727
  %vm731 = vcmask 130048
  %v733 = vsel %vm731, %v729, 0
  %v736 = vsel %vm731, %v730, 0
  %738 = vmatprep.subr.bf16.mxu0 0
  %739 = vmatpush1.bf16.msra.mxu0 %v716
  %740 = vmatprep.subr.bf16.mxu0 0
  %741 = vmatpush1.bf16.msra.mxu0 0
  %742 = vmatprep.subr.bf16.mxu0 0
  %743 = vmatpush1.bf16.msra.mxu0 0
  %744 = vmatprep.subr.bf16.mxu0 0
  %745 = vmatpush1.bf16.msra.mxu0 0
  %746 = vmatprep.subr.bf16.mxu0 0
  %747 = vmatpush1.bf16.msra.mxu0 0
  %748 = vmatprep.subr.bf16.mxu0 0
  %749 = vmatpush1.bf16.msra.mxu0 0
  %750 = vmatprep.subr.bf16.mxu0 0
  %751 = vmatpush1.bf16.msra.mxu0 0
  %752 = vmatprep.subr.bf16.mxu0 0
  %753 = vmatpush1.bf16.msra.mxu0 0
  %754 = vmatprep.subr.bf16.mxu0 0
  %755 = vmatpush1.bf16.msra.mxu0 0
  %756 = vmatprep.subr.bf16.mxu0 0
  %757 = vmatpush1.bf16.msra.mxu0 0
  %758 = vmatprep.subr.bf16.mxu0 0
  %759 = vmatpush1.bf16.msra.mxu0 0
  %760 = vmatprep.subr.bf16.mxu0 0
  %761 = vmatpush1.bf16.msra.mxu0 0
  %762 = vmatprep.subr.bf16.mxu0 0
  %763 = vmatpush1.bf16.msra.mxu0 0
  %764 = vmatprep.subr.bf16.mxu0 0
  %765 = vmatpush1.bf16.msra.mxu0 0
  %766 = vmatprep.subr.bf16.mxu0 0
  %767 = vmatpush1.bf16.msra.mxu0 0
  %768 = vmatprep.subr.bf16.mxu0 0
  %769 = vmatpush1.bf16.msra.mxu0 0
  %770 = vmatprep.mubr.bf16.mxu0 0
  %771 = vmatmul.mubr.bf16.gmra.mrb[0].mxu0 %v733
  %v772 = vpop.f32.mrb[0].mxu0
  %v773 = vadd.f32 0.0, %v772
  %v774 = vpop.f32.mrb[0].mxu0
  %v775 = vpop.f32.mrb[0].mxu0
  %v776 = vadd.f32 0.0, %v775
  %v777 = vpop.f32.mrb[0].mxu0
  %778 = vmatprep.mubr.bf16.mxu0 0
  %779 = vmatmul.mubr.bf16.gmra.mrb[0].mxu0 %v736
  %v780 = vpop.f32.mrb[0].mxu0
  %v781 = vadd.f32 0.0, %v780
  %v782 = vpop.f32.mrb[0].mxu0
  %v783 = vpop.f32.mrb[0].mxu0
  %v784 = vadd.f32 0.0, %v783
  %v785 = vpop.f32.mrb[0].mxu0
  %786 = vdwg.mxu0
  %v787 = vld [vmem:[%s63] sm:$0xff]
  %v788 = vld [vmem:[%s63 + $0x8] sm:$0xff]
  %v789 = vld [vmem:[%s63 + $0x10] sm:$0xff]
  %v790 = vld [vmem:[%s63 + $0x18] sm:$0xff]
  %792 = vset.pattern.permute.xlu0 0
  %793 = vperm.xlu0 %792, %v787
  %v794 = vpop.permute.xlu0 %793
  %797 = vset.pattern.permute.xlu0 0
  %798 = vperm.xlu0 %797, %v788
  %v799 = vpop.permute.xlu0 %798
  %802 = vset.pattern.permute.xlu0 0
  %803 = vperm.xlu0 %802, %v789
  %v804 = vpop.permute.xlu0 %803
  %807 = vset.pattern.permute.xlu0 0
  %808 = vperm.xlu0 %807, %v790
  %v809 = vpop.permute.xlu0 %808
  %v811 = vmul.f32 %v773, %v794
  %v812 = vmul.f32 %v776, %v799
  %v813 = vmul.f32 %v781, %v804
  %v814 = vmul.f32 %v784, %v809
  %v815 = vld [vmem:[%s65] sm:$0xff]
  %v816 = vld [vmem:[%s65 + $0x8] sm:$0xff]
  %v817 = vld [vmem:[%s65 + $0x10] sm:$0xff]
  %v818 = vld [vmem:[%s65 + $0x18] sm:$0xff]
  %820 = vset.pattern.permute.xlu0 0
  %821 = vperm.xlu0 %820, %v815
  %v822 = vpop.permute.xlu0 %821
  %825 = vset.pattern.permute.xlu0 0
  %826 = vperm.xlu0 %825, %v816
  %v827 = vpop.permute.xlu0 %826
  %830 = vset.pattern.permute.xlu0 0
  %831 = vperm.xlu0 %830, %v817
  %v832 = vpop.permute.xlu0 %831
  %835 = vset.pattern.permute.xlu0 0
  %836 = vperm.xlu0 %835, %v818
  %v837 = vpop.permute.xlu0 %836
  %v839 = vadd.f32 %v811, %v822
  %v840 = vadd.f32 %v812, %v827
  %v841 = vadd.f32 %v813, %v832
  %v842 = vadd.f32 %v814, %v837
  %843 = vrot.lane.b32.xlu0 %v714, 1
  %v844 = vpop.permute.xlu0 %843
  %845 = vrot.lane.b32.xlu0 %v715, 1
  %v846 = vpop.permute.xlu0 %845
  %v847 = vmul.f32 %v844, %v209
  %v848 = vmul.f32 %v846, %v209
  %849 = vrot.lane.b32.xlu0 %v714, 127
  %v850 = vpop.permute.xlu0 %849
  %851 = vrot.lane.b32.xlu0 %v715, 127
  %v852 = vpop.permute.xlu0 %851
  %v853 = vmul.f32 %v850, %v229
  %v854 = vmul.f32 %v852, %v229
  %v855 = vpack.c.bf16 %v848, %v847
  %v856 = vpack.c.bf16 %v854, %v853
  %v857 = vld [vmem:[%s43] sm:$0xf]
  %v858 = vld [vmem:[%s43 + $0x4] sm:$0xf]
  %v859 = vld [vmem:[%s43 + $0x8] sm:$0xf]
  %v860 = vld [vmem:[%s43 + $0xc] sm:$0xf]
  %v865 = vunpack.c.l.b16 %v857
  %v866 = vunpack.c.l.b16 %v858
  %v867 = vunpack.c.l.b16 %v859
  %v868 = vunpack.c.l.b16 %v860
  %v869 = vpack.c.b16 %v866, %v865
  %v870 = vpack.c.b16 %v868, %v867
  %v872 = vsel %vm556, %v869, 0
  %v875 = vsel %vm556, %v870, 0
  %877 = vmatprep.subr.bf16.mxu0 0
  %878 = vmatpush1.bf16.msra.mxu0 %v855
  %879 = vmatprep.subr.bf16.mxu0 0
  %880 = vmatpush1.bf16.msra.mxu0 %v716
  %881 = vmatprep.subr.bf16.mxu0 0
  %882 = vmatpush1.bf16.msra.mxu0 %v856
  %883 = vmatprep.subr.bf16.mxu0 0
  %884 = vmatpush1.bf16.msra.mxu0 0
  %885 = vmatprep.subr.bf16.mxu0 0
  %886 = vmatpush1.bf16.msra.mxu0 0
  %887 = vmatprep.subr.bf16.mxu0 0
  %888 = vmatpush1.bf16.msra.mxu0 0
  %889 = vmatprep.subr.bf16.mxu0 0
  %890 = vmatpush1.bf16.msra.mxu0 0
  %891 = vmatprep.subr.bf16.mxu0 0
  %892 = vmatpush1.bf16.msra.mxu0 0
  %893 = vmatprep.subr.bf16.mxu0 0
  %894 = vmatpush1.bf16.msra.mxu0 0
  %895 = vmatprep.subr.bf16.mxu0 0
  %896 = vmatpush1.bf16.msra.mxu0 0
  %897 = vmatprep.subr.bf16.mxu0 0
  %898 = vmatpush1.bf16.msra.mxu0 0
  %899 = vmatprep.subr.bf16.mxu0 0
  %900 = vmatpush1.bf16.msra.mxu0 0
  %901 = vmatprep.subr.bf16.mxu0 0
  %902 = vmatpush1.bf16.msra.mxu0 0
  %903 = vmatprep.subr.bf16.mxu0 0
  %904 = vmatpush1.bf16.msra.mxu0 0
  %905 = vmatprep.subr.bf16.mxu0 0
  %906 = vmatpush1.bf16.msra.mxu0 0
  %907 = vmatprep.subr.bf16.mxu0 0
  %908 = vmatpush1.bf16.msra.mxu0 0
  %909 = vmatprep.mubr.bf16.mxu0 0
  %910 = vmatmul.mubr.bf16.gmra.mrb[0].mxu0 %v872
  %v911 = vpop.f32.mrb[0].mxu0
  %v912 = vadd.f32 0.0, %v911
  %v913 = vpop.f32.mrb[0].mxu0
  %v914 = vpop.f32.mrb[0].mxu0
  %v915 = vadd.f32 0.0, %v914
  %v916 = vpop.f32.mrb[0].mxu0
  %917 = vmatprep.mubr.bf16.mxu0 0
  %918 = vmatmul.mubr.bf16.gmra.mrb[0].mxu0 %v875
  %v919 = vpop.f32.mrb[0].mxu0
  %v920 = vadd.f32 0.0, %v919
  %v921 = vpop.f32.mrb[0].mxu0
  %v922 = vpop.f32.mrb[0].mxu0
  %v923 = vadd.f32 0.0, %v922
  %v924 = vpop.f32.mrb[0].mxu0
  %925 = vdwg.mxu0
  %v926 = vld [vmem:[%s45] sm:$0xff]
  %v927 = vld [vmem:[%s45 + $0x8] sm:$0xff]
  %v928 = vld [vmem:[%s45 + $0x10] sm:$0xff]
  %v929 = vld [vmem:[%s45 + $0x18] sm:$0xff]
  %931 = vset.pattern.permute.xlu0 0
  %932 = vperm.xlu0 %931, %v926
  %v933 = vpop.permute.xlu0 %932
  %936 = vset.pattern.permute.xlu0 0
  %937 = vperm.xlu0 %936, %v927
  %v938 = vpop.permute.xlu0 %937
  %941 = vset.pattern.permute.xlu0 0
  %942 = vperm.xlu0 %941, %v928
  %v943 = vpop.permute.xlu0 %942
  %946 = vset.pattern.permute.xlu0 0
  %947 = vperm.xlu0 %946, %v929
  %v948 = vpop.permute.xlu0 %947
  %v950 = vmul.f32 %v912, %v933
  %v951 = vmul.f32 %v915, %v938
  %v952 = vmul.f32 %v920, %v943
  %v953 = vmul.f32 %v923, %v948
  %v954 = vld [vmem:[%s47] sm:$0xff]
  %v955 = vld [vmem:[%s47 + $0x8] sm:$0xff]
  %v956 = vld [vmem:[%s47 + $0x10] sm:$0xff]
  %v957 = vld [vmem:[%s47 + $0x18] sm:$0xff]
  %959 = vset.pattern.permute.xlu0 0
  %960 = vperm.xlu0 %959, %v954
  %v961 = vpop.permute.xlu0 %960
  %964 = vset.pattern.permute.xlu0 0
  %965 = vperm.xlu0 %964, %v955
  %v966 = vpop.permute.xlu0 %965
  %969 = vset.pattern.permute.xlu0 0
  %970 = vperm.xlu0 %969, %v956
  %v971 = vpop.permute.xlu0 %970
  %974 = vset.pattern.permute.xlu0 0
  %975 = vperm.xlu0 %974, %v957
  %v976 = vpop.permute.xlu0 %975
  %v978 = vadd.f32 %v950, %v961
  %v979 = vadd.f32 %v951, %v966
  %v980 = vadd.f32 %v952, %v971
  %v981 = vadd.f32 %v953, %v976
  %v982 = vmax.f32 %v978, 0.0
  %v983 = vmax.f32 %v979, 0.0
  %v984 = vmax.f32 %v980, 0.0
  %v985 = vmax.f32 %v981, 0.0
  %986 = vrot.lane.b32.xlu0 %v982, 1
  %v987 = vpop.permute.xlu0 %986
  %988 = vrot.lane.b32.xlu0 %v983, 1
  %v989 = vpop.permute.xlu0 %988
  %990 = vrot.lane.b32.xlu0 %v984, 1
  %v991 = vpop.permute.xlu0 %990
  %992 = vrot.lane.b32.xlu0 %v985, 1
  %v993 = vpop.permute.xlu0 %992
  %v994 = vmul.f32 %v987, %v209
  %v995 = vmul.f32 %v989, %v209
  %v996 = vmul.f32 %v991, %v209
  %v997 = vmul.f32 %v993, %v209
  %998 = vrot.lane.b32.xlu0 %v982, 127
  %v999 = vpop.permute.xlu0 %998
  %1000 = vrot.lane.b32.xlu0 %v983, 127
  %v1001 = vpop.permute.xlu0 %1000
  %1002 = vrot.lane.b32.xlu0 %v984, 127
  %v1003 = vpop.permute.xlu0 %1002
  %1004 = vrot.lane.b32.xlu0 %v985, 127
  %v1005 = vpop.permute.xlu0 %1004
  %v1006 = vmul.f32 %v999, %v229
  %v1007 = vmul.f32 %v1001, %v229
  %v1008 = vmul.f32 %v1003, %v229
  %v1009 = vmul.f32 %v1005, %v229
  %v1010 = vpack.c.bf16 %v995, %v994
  %v1011 = vpack.c.bf16 %v997, %v996
  %v1012 = vpack.c.bf16 %v983, %v982
  %v1013 = vpack.c.bf16 %v985, %v984
  %v1014 = vpack.c.bf16 %v1007, %v1006
  %v1015 = vpack.c.bf16 %v1009, %v1008
  %v1016 = vld [vmem:[%s49] sm:$0xf]
  %v1017 = vld [vmem:[%s49 + $0x4] sm:$0xf]
  %v1020 = vunpack.c.l.b16 %v1016
  %v1021 = vunpack.c.l.b16 %v1017
  %v1022 = vpack.c.b16 %v1021, %v1020
  %vm1023 = vcmask 785408
  %v1025 = vsel %vm1023, %v1022, 0
  %1027 = vmatprep.subr.bf16.mxu0 0
  %1028 = vmatpush1.bf16.msra.mxu0 %v1010
  %1029 = vmatprep.subr.bf16.mxu0 0
  %1030 = vmatpush1.bf16.msra.mxu0 %v1011
  %1031 = vmatprep.subr.bf16.mxu0 0
  %1032 = vmatpush1.bf16.msra.mxu0 %v1012
  %1033 = vmatprep.subr.bf16.mxu0 0
  %1034 = vmatpush1.bf16.msra.mxu0 %v1013
  %1035 = vmatprep.subr.bf16.mxu0 0
  %1036 = vmatpush1.bf16.msra.mxu0 %v1014
  %1037 = vmatprep.subr.bf16.mxu0 0
  %1038 = vmatpush1.bf16.msra.mxu0 %v1015
  %1039 = vmatprep.subr.bf16.mxu0 0
  %1040 = vmatpush1.bf16.msra.mxu0 0
  %1041 = vmatprep.subr.bf16.mxu0 0
  %1042 = vmatpush1.bf16.msra.mxu0 0
  %1043 = vmatprep.subr.bf16.mxu0 0
  %1044 = vmatpush1.bf16.msra.mxu0 0
  %1045 = vmatprep.subr.bf16.mxu0 0
  %1046 = vmatpush1.bf16.msra.mxu0 0
  %1047 = vmatprep.subr.bf16.mxu0 0
  %1048 = vmatpush1.bf16.msra.mxu0 0
  %1049 = vmatprep.subr.bf16.mxu0 0
  %1050 = vmatpush1.bf16.msra.mxu0 0
  %1051 = vmatprep.subr.bf16.mxu0 0
  %1052 = vmatpush1.bf16.msra.mxu0 0
  %1053 = vmatprep.subr.bf16.mxu0 0
  %1054 = vmatpush1.bf16.msra.mxu0 0
  %1055 = vmatprep.subr.bf16.mxu0 0
  %1056 = vmatpush1.bf16.msra.mxu0 0
  %1057 = vmatprep.subr.bf16.mxu0 0
  %1058 = vmatpush1.bf16.msra.mxu0 0
  %1059 = vmatprep.mubr.bf16.mxu0 0
  %1060 = vmatmul.mubr.bf16.gmra.mrb[0].mxu0 %v1025
  %v1061 = vpop.f32.mrb[0].mxu0
  %v1062 = vadd.f32 0.0, %v1061
  %v1063 = vpop.f32.mrb[0].mxu0
  %v1064 = vpop.f32.mrb[0].mxu0
  %v1065 = vadd.f32 0.0, %v1064
  %v1066 = vpop.f32.mrb[0].mxu0
  %1067 = vdwg.mxu0
  %v1068 = vld [vmem:[%s51] sm:$0xff]
  %v1069 = vld [vmem:[%s51 + $0x8] sm:$0xff]
  %1071 = vset.pattern.permute.xlu0 0
  %1072 = vperm.xlu0 %1071, %v1068
  %v1073 = vpop.permute.xlu0 %1072
  %1076 = vset.pattern.permute.xlu0 0
  %1077 = vperm.xlu0 %1076, %v1069
  %v1078 = vpop.permute.xlu0 %1077
  %v1080 = vmul.f32 %v1062, %v1073
  %v1081 = vmul.f32 %v1065, %v1078
  %v1082 = vld [vmem:[%s53] sm:$0xff]
  %v1083 = vld [vmem:[%s53 + $0x8] sm:$0xff]
  %1085 = vset.pattern.permute.xlu0 0
  %1086 = vperm.xlu0 %1085, %v1082
  %v1087 = vpop.permute.xlu0 %1086
  %1090 = vset.pattern.permute.xlu0 0
  %1091 = vperm.xlu0 %1090, %v1083
  %v1092 = vpop.permute.xlu0 %1091
  %v1094 = vadd.f32 %v1080, %v1087
  %v1095 = vadd.f32 %v1081, %v1092
  %v1096 = vmax.f32 %v1094, 0.0
  %v1097 = vmax.f32 %v1095, 0.0
  %1098 = vrot.lane.b32.xlu0 %v1096, 1
  %v1099 = vpop.permute.xlu0 %1098
  %1100 = vrot.lane.b32.xlu0 %v1097, 1
  %v1101 = vpop.permute.xlu0 %1100
  %v1102 = vmul.f32 %v1099, %v209
  %v1103 = vmul.f32 %v1101, %v209
  %1104 = vrot.lane.b32.xlu0 %v1096, 127
  %v1105 = vpop.permute.xlu0 %1104
  %1106 = vrot.lane.b32.xlu0 %v1097, 127
  %v1107 = vpop.permute.xlu0 %1106
  %v1108 = vmul.f32 %v1105, %v229
  %v1109 = vmul.f32 %v1107, %v229
  %v1110 = vpack.c.bf16 %v1103, %v1102
  %v1111 = vpack.c.bf16 %v1097, %v1096
  %v1112 = vpack.c.bf16 %v1109, %v1108
  %v1113 = vld [vmem:[%s55] sm:$0xf]
  %v1114 = vld [vmem:[%s55 + $0x4] sm:$0xf]
  %v1115 = vld [vmem:[%s55 + $0x8] sm:$0xf]
  %v1116 = vld [vmem:[%s55 + $0xc] sm:$0xf]
  %v1121 = vunpack.c.l.b16 %v1113
  %v1122 = vunpack.c.l.b16 %v1114
  %v1123 = vunpack.c.l.b16 %v1115
  %v1124 = vunpack.c.l.b16 %v1116
  %v1125 = vpack.c.b16 %v1122, %v1121
  %v1126 = vpack.c.b16 %v1124, %v1123
  %v1128 = vsel %vm556, %v1125, 0
  %v1131 = vsel %vm556, %v1126, 0
  %1133 = vmatprep.subr.bf16.mxu0 0
  %1134 = vmatpush1.bf16.msra.mxu0 %v1110
  %1135 = vmatprep.subr.bf16.mxu0 0
  %1136 = vmatpush1.bf16.msra.mxu0 %v1111
  %1137 = vmatprep.subr.bf16.mxu0 0
  %1138 = vmatpush1.bf16.msra.mxu0 %v1112
  %1139 = vmatprep.subr.bf16.mxu0 0
  %1140 = vmatpush1.bf16.msra.mxu0 0
  %1141 = vmatprep.subr.bf16.mxu0 0
  %1142 = vmatpush1.bf16.msra.mxu0 0
  %1143 = vmatprep.subr.bf16.mxu0 0
  %1144 = vmatpush1.bf16.msra.mxu0 0
  %1145 = vmatprep.subr.bf16.mxu0 0
  %1146 = vmatpush1.bf16.msra.mxu0 0
  %1147 = vmatprep.subr.bf16.mxu0 0
  %1148 = vmatpush1.bf16.msra.mxu0 0
  %1149 = vmatprep.subr.bf16.mxu0 0
  %1150 = vmatpush1.bf16.msra.mxu0 0
  %1151 = vmatprep.subr.bf16.mxu0 0
  %1152 = vmatpush1.bf16.msra.mxu0 0
  %1153 = vmatprep.subr.bf16.mxu0 0
  %1154 = vmatpush1.bf16.msra.mxu0 0
  %1155 = vmatprep.subr.bf16.mxu0 0
  %1156 = vmatpush1.bf16.msra.mxu0 0
  %1157 = vmatprep.subr.bf16.mxu0 0
  %1158 = vmatpush1.bf16.msra.mxu0 0
  %1159 = vmatprep.subr.bf16.mxu0 0
  %1160 = vmatpush1.bf16.msra.mxu0 0
  %1161 = vmatprep.subr.bf16.mxu0 0
  %1162 = vmatpush1.bf16.msra.mxu0 0
  %1163 = vmatprep.subr.bf16.mxu0 0
  %1164 = vmatpush1.bf16.msra.mxu0 0
  %1165 = vmatprep.mubr.bf16.mxu0 0
  %1166 = vmatmul.mubr.bf16.gmra.mrb[0].mxu0 %v1128
  %v1167 = vpop.f32.mrb[0].mxu0
  %v1168 = vadd.f32 0.0, %v1167
  %v1169 = vpop.f32.mrb[0].mxu0
  %v1170 = vpop.f32.mrb[0].mxu0
  %v1171 = vadd.f32 0.0, %v1170
  %v1172 = vpop.f32.mrb[0].mxu0
  %1173 = vmatprep.mubr.bf16.mxu0 0
  %1174 = vmatmul.mubr.bf16.gmra.mrb[0].mxu0 %v1131
  %v1175 = vpop.f32.mrb[0].mxu0
  %v1176 = vadd.f32 0.0, %v1175
  %v1177 = vpop.f32.mrb[0].mxu0
  %v1178 = vpop.f32.mrb[0].mxu0
  %v1179 = vadd.f32 0.0, %v1178
  %v1180 = vpop.f32.mrb[0].mxu0
  %1181 = vdwg.mxu0
  %v1182 = vld [vmem:[%s57] sm:$0xff]
  %v1183 = vld [vmem:[%s57 + $0x8] sm:$0xff]
  %v1184 = vld [vmem:[%s57 + $0x10] sm:$0xff]
  %v1185 = vld [vmem:[%s57 + $0x18] sm:$0xff]
  %1187 = vset.pattern.permute.xlu0 0
  %1188 = vperm.xlu0 %1187, %v1182
  %v1189 = vpop.permute.xlu0 %1188
  %1192 = vset.pattern.permute.xlu0 0
  %1193 = vperm.xlu0 %1192, %v1183
  %v1194 = vpop.permute.xlu0 %1193
  %1197 = vset.pattern.permute.xlu0 0
  %1198 = vperm.xlu0 %1197, %v1184
  %v1199 = vpop.permute.xlu0 %1198
  %1202 = vset.pattern.permute.xlu0 0
  %1203 = vperm.xlu0 %1202, %v1185
  %v1204 = vpop.permute.xlu0 %1203
  %v1206 = vmul.f32 %v1168, %v1189
  %v1207 = vmul.f32 %v1171, %v1194
  %v1208 = vmul.f32 %v1176, %v1199
  %v1209 = vmul.f32 %v1179, %v1204
  %v1210 = vld [vmem:[%s59] sm:$0xff]
  %v1211 = vld [vmem:[%s59 + $0x8] sm:$0xff]
  %v1212 = vld [vmem:[%s59 + $0x10] sm:$0xff]
  %v1213 = vld [vmem:[%s59 + $0x18] sm:$0xff]
  %1215 = vset.pattern.permute.xlu0 0
  %1216 = vperm.xlu0 %1215, %v1210
  %v1217 = vpop.permute.xlu0 %1216
  %1220 = vset.pattern.permute.xlu0 0
  %1221 = vperm.xlu0 %1220, %v1211
  %v1222 = vpop.permute.xlu0 %1221
  %1225 = vset.pattern.permute.xlu0 0
  %1226 = vperm.xlu0 %1225, %v1212
  %v1227 = vpop.permute.xlu0 %1226
  %1230 = vset.pattern.permute.xlu0 0
  %1231 = vperm.xlu0 %1230, %v1213
  %v1232 = vpop.permute.xlu0 %1231
  %v1234 = vadd.f32 %v1206, %v1217
  %v1235 = vadd.f32 %v1207, %v1222
  %v1236 = vadd.f32 %v1208, %v1227
  %v1237 = vadd.f32 %v1209, %v1232
  %v1238 = vadd.f32 %v1234, %v839
  %v1239 = vadd.f32 %v1235, %v840
  %v1240 = vadd.f32 %v1236, %v841
  %v1241 = vadd.f32 %v1237, %v842
  %v1242 = vmax.f32 %v1238, 0.0
  %v1243 = vmax.f32 %v1239, 0.0
  %v1244 = vmax.f32 %v1240, 0.0
  %v1245 = vmax.f32 %v1241, 0.0
  %v1246 = vpack.c.bf16 %v1243, %v1242
  %v1247 = vpack.c.bf16 %v1245, %v1244
  %v1248 = vld [vmem:[%s85] sm:$0xf]
  %v1249 = vld [vmem:[%s85 + $0x4] sm:$0xf]
  %v1250 = vld [vmem:[%s85 + $0x8] sm:$0xf]
  %v1251 = vld [vmem:[%s85 + $0xc] sm:$0xf]
  %v1252 = vld [vmem:[%s85 + $0x10] sm:$0xf]
  %v1253 = vld [vmem:[%s85 + $0x14] sm:$0xf]
  %v1254 = vld [vmem:[%s85 + $0x18] sm:$0xf]
  %v1255 = vld [vmem:[%s85 + $0x1c] sm:$0xf]
  %v1264 = vunpack.c.l.b16 %v1248
  %v1265 = vunpack.c.l.b16 %v1249
  %v1266 = vunpack.c.l.b16 %v1250
  %v1267 = vunpack.c.l.b16 %v1251
  %v1268 = vunpack.c.l.b16 %v1252
  %v1269 = vunpack.c.l.b16 %v1253
  %v1270 = vunpack.c.l.b16 %v1254
  %v1271 = vunpack.c.l.b16 %v1255
  %v1272 = vpack.c.b16 %v1265, %v1264
  %v1273 = vpack.c.b16 %v1267, %v1266
  %v1274 = vpack.c.b16 %v1269, %v1268
  %v1275 = vpack.c.b16 %v1271, %v1270
  %vm1276 = vcmask 261120
  %v1278 = vsel %vm1276, %v1272, 0
  %v1281 = vsel %vm1276, %v1273, 0
  %v1284 = vsel %vm1276, %v1274, 0
  %v1287 = vsel %vm1276, %v1275, 0
  %1289 = vmatprep.subr.bf16.mxu0 0
  %1290 = vmatpush1.bf16.msra.mxu0 %v1246
  %1291 = vmatprep.subr.bf16.mxu0 0
  %1292 = vmatpush1.bf16.msra.mxu0 %v1247
  %1293 = vmatprep.subr.bf16.mxu0 0
  %1294 = vmatpush1.bf16.msra.mxu0 0
  %1295 = vmatprep.subr.bf16.mxu0 0
  %1296 = vmatpush1.bf16.msra.mxu0 0
  %1297 = vmatprep.subr.bf16.mxu0 0
  %1298 = vmatpush1.bf16.msra.mxu0 0
  %1299 = vmatprep.subr.bf16.mxu0 0
  %1300 = vmatpush1.bf16.msra.mxu0 0
  %1301 = vmatprep.subr.bf16.mxu0 0
  %1302 = vmatpush1.bf16.msra.mxu0 0
  %1303 = vmatprep.subr.bf16.mxu0 0
  %1304 = vmatpush1.bf16.msra.mxu0 0
  %1305 = vmatprep.subr.bf16.mxu0 0
  %1306 = vmatpush1.bf16.msra.mxu0 0
  %1307 = vmatprep.subr.bf16.mxu0 0
  %1308 = vmatpush1.bf16.msra.mxu0 0
  %1309 = vmatprep.subr.bf16.mxu0 0
  %1310 = vmatpush1.bf16.msra.mxu0 0
  %1311 = vmatprep.subr.bf16.mxu0 0
  %1312 = vmatpush1.bf16.msra.mxu0 0
  %1313 = vmatprep.subr.bf16.mxu0 0
  %1314 = vmatpush1.bf16.msra.mxu0 0
  %1315 = vmatprep.subr.bf16.mxu0 0
  %1316 = vmatpush1.bf16.msra.mxu0 0
  %1317 = vmatprep.subr.bf16.mxu0 0
  %1318 = vmatpush1.bf16.msra.mxu0 0
  %1319 = vmatprep.subr.bf16.mxu0 0
  %1320 = vmatpush1.bf16.msra.mxu0 0
  %1321 = vmatprep.mubr.bf16.mxu0 0
  %1322 = vmatmul.mubr.bf16.gmra.mrb[0].mxu0 %v1278
  %v1323 = vpop.f32.mrb[0].mxu0
  %v1324 = vadd.f32 0.0, %v1323
  %v1325 = vpop.f32.mrb[0].mxu0
  %v1326 = vpop.f32.mrb[0].mxu0
  %v1327 = vadd.f32 0.0, %v1326
  %v1328 = vpop.f32.mrb[0].mxu0
  %1329 = vmatprep.mubr.bf16.mxu0 0
  %1330 = vmatmul.mubr.bf16.gmra.mrb[0].mxu0 %v1281
  %v1331 = vpop.f32.mrb[0].mxu0
  %v1332 = vadd.f32 0.0, %v1331
  %v1333 = vpop.f32.mrb[0].mxu0
  %v1334 = vpop.f32.mrb[0].mxu0
  %v1335 = vadd.f32 0.0, %v1334
  %v1336 = vpop.f32.mrb[0].mxu0
  %1337 = vmatprep.mubr.bf16.mxu0 0
  %1338 = vmatmul.mubr.bf16.gmra.mrb[0].mxu0 %v1284
  %v1339 = vpop.f32.mrb[0].mxu0
  %v1340 = vadd.f32 0.0, %v1339
  %v1341 = vpop.f32.mrb[0].mxu0
  %v1342 = vpop.f32.mrb[0].mxu0
  %v1343 = vadd.f32 0.0, %v1342
  %v1344 = vpop.f32.mrb[0].mxu0
  %1345 = vmatprep.mubr.bf16.mxu0 0
  %1346 = vmatmul.mubr.bf16.gmra.mrb[0].mxu0 %v1287
  %v1347 = vpop.f32.mrb[0].mxu0
  %v1348 = vadd.f32 0.0, %v1347
  %v1349 = vpop.f32.mrb[0].mxu0
  %v1350 = vpop.f32.mrb[0].mxu0
  %v1351 = vadd.f32 0.0, %v1350
  %v1352 = vpop.f32.mrb[0].mxu0
  %1353 = vdwg.mxu0
  %v1354 = vld [vmem:[%s87] sm:$0xff]
  %v1355 = vld [vmem:[%s87 + $0x8] sm:$0xff]
  %v1356 = vld [vmem:[%s87 + $0x10] sm:$0xff]
  %v1357 = vld [vmem:[%s87 + $0x18] sm:$0xff]
  %v1358 = vld [vmem:[%s87 + $0x20] sm:$0xff]
  %v1359 = vld [vmem:[%s87 + $0x28] sm:$0xff]
  %v1360 = vld [vmem:[%s87 + $0x30] sm:$0xff]
  %v1361 = vld [vmem:[%s87 + $0x38] sm:$0xff]
  %1363 = vset.pattern.permute.xlu0 0
  %1364 = vperm.xlu0 %1363, %v1354
  %v1365 = vpop.permute.xlu0 %1364
  %1368 = vset.pattern.permute.xlu0 0
  %1369 = vperm.xlu0 %1368, %v1355
  %v1370 = vpop.permute.xlu0 %1369
  %1373 = vset.pattern.permute.xlu0 0
  %1374 = vperm.xlu0 %1373, %v1356
  %v1375 = vpop.permute.xlu0 %1374
  %1378 = vset.pattern.permute.xlu0 0
  %1379 = vperm.xlu0 %1378, %v1357
  %v1380 = vpop.permute.xlu0 %1379
  %1383 = vset.pattern.permute.xlu0 0
  %1384 = vperm.xlu0 %1383, %v1358
  %v1385 = vpop.permute.xlu0 %1384
  %1388 = vset.pattern.permute.xlu0 0
  %1389 = vperm.xlu0 %1388, %v1359
  %v1390 = vpop.permute.xlu0 %1389
  %1393 = vset.pattern.permute.xlu0 0
  %1394 = vperm.xlu0 %1393, %v1360
  %v1395 = vpop.permute.xlu0 %1394
  %1398 = vset.pattern.permute.xlu0 0
  %1399 = vperm.xlu0 %1398, %v1361
  %v1400 = vpop.permute.xlu0 %1399
  %v1402 = vmul.f32 %v1324, %v1365
  %v1403 = vmul.f32 %v1327, %v1370
  %v1404 = vmul.f32 %v1332, %v1375
  %v1405 = vmul.f32 %v1335, %v1380
  %v1406 = vmul.f32 %v1340, %v1385
  %v1407 = vmul.f32 %v1343, %v1390
  %v1408 = vmul.f32 %v1348, %v1395
  %v1409 = vmul.f32 %v1351, %v1400
  %v1410 = vld [vmem:[%s89] sm:$0xff]
  %v1411 = vld [vmem:[%s89 + $0x8] sm:$0xff]
  %v1412 = vld [vmem:[%s89 + $0x10] sm:$0xff]
  %v1413 = vld [vmem:[%s89 + $0x18] sm:$0xff]
  %v1414 = vld [vmem:[%s89 + $0x20] sm:$0xff]
  %v1415 = vld [vmem:[%s89 + $0x28] sm:$0xff]
  %v1416 = vld [vmem:[%s89 + $0x30] sm:$0xff]
  %v1417 = vld [vmem:[%s89 + $0x38] sm:$0xff]
  %1419 = vset.pattern.permute.xlu0 0
  %1420 = vperm.xlu0 %1419, %v1410
  %v1421 = vpop.permute.xlu0 %1420
  %1424 = vset.pattern.permute.xlu0 0
  %1425 = vperm.xlu0 %1424, %v1411
  %v1426 = vpop.permute.xlu0 %1425
  %1429 = vset.pattern.permute.xlu0 0
  %1430 = vperm.xlu0 %1429, %v1412
  %v1431 = vpop.permute.xlu0 %1430
  %1434 = vset.pattern.permute.xlu0 0
  %1435 = vperm.xlu0 %1434, %v1413
  %v1436 = vpop.permute.xlu0 %1435
  %1439 = vset.pattern.permute.xlu0 0
  %1440 = vperm.xlu0 %1439, %v1414
  %v1441 = vpop.permute.xlu0 %1440
  %1444 = vset.pattern.permute.xlu0 0
  %1445 = vperm.xlu0 %1444, %v1415
  %v1446 = vpop.permute.xlu0 %1445
  %1449 = vset.pattern.permute.xlu0 0
  %1450 = vperm.xlu0 %1449, %v1416
  %v1451 = vpop.permute.xlu0 %1450
  %1454 = vset.pattern.permute.xlu0 0
  %1455 = vperm.xlu0 %1454, %v1417
  %v1456 = vpop.permute.xlu0 %1455
  %v1458 = vadd.f32 %v1402, %v1421
  %v1459 = vadd.f32 %v1403, %v1426
  %v1460 = vadd.f32 %v1404, %v1431
  %v1461 = vadd.f32 %v1405, %v1436
  %v1462 = vadd.f32 %v1406, %v1441
  %v1463 = vadd.f32 %v1407, %v1446
  %v1464 = vadd.f32 %v1408, %v1451
  %v1465 = vadd.f32 %v1409, %v1456
  %1466 = vrot.lane.b32.xlu0 %v1242, 1
  %v1467 = vpop.permute.xlu0 %1466
  %1468 = vrot.lane.b32.xlu0 %v1243, 1
  %v1469 = vpop.permute.xlu0 %1468
  %1470 = vrot.lane.b32.xlu0 %v1244, 1
  %v1471 = vpop.permute.xlu0 %1470
  %1472 = vrot.lane.b32.xlu0 %v1245, 1
  %v1473 = vpop.permute.xlu0 %1472
  %v1474 = vmul.f32 %v1467, %v209
  %v1475 = vmul.f32 %v1469, %v209
  %v1476 = vmul.f32 %v1471, %v209
  %v1477 = vmul.f32 %v1473, %v209
  %1478 = vrot.lane.b32.xlu0 %v1242, 127
  %v1479 = vpop.permute.xlu0 %1478
  %1480 = vrot.lane.b32.xlu0 %v1243, 127
  %v1481 = vpop.permute.xlu0 %1480
  %1482 = vrot.lane.b32.xlu0 %v1244, 127
  %v1483 = vpop.permute.xlu0 %1482
  %1484 = vrot.lane.b32.xlu0 %v1245, 127
  %v1485 = vpop.permute.xlu0 %1484
  %v1486 = vmul.f32 %v1479, %v229
  %v1487 = vmul.f32 %v1481, %v229
  %v1488 = vmul.f32 %v1483, %v229
  %v1489 = vmul.f32 %v1485, %v229
  %v1490 = vpack.c.bf16 %v1475, %v1474
  %v1491 = vpack.c.bf16 %v1477, %v1476
  %v1492 = vpack.c.bf16 %v1487, %v1486
  %v1493 = vpack.c.bf16 %v1489, %v1488
  %v1494 = vld [vmem:[%s67] sm:$0xf]
  %v1495 = vld [vmem:[%s67 + $0x4] sm:$0xf]
  %v1496 = vld [vmem:[%s67 + $0x8] sm:$0xf]
  %v1497 = vld [vmem:[%s67 + $0xc] sm:$0xf]
  %v1498 = vld [vmem:[%s67 + $0x10] sm:$0xf]
  %v1499 = vld [vmem:[%s67 + $0x14] sm:$0xf]
  %v1500 = vld [vmem:[%s67 + $0x18] sm:$0xf]
  %v1501 = vld [vmem:[%s67 + $0x1c] sm:$0xf]
  %v1510 = vunpack.c.l.b16 %v1494
  %v1511 = vunpack.c.l.b16 %v1495
  %v1512 = vunpack.c.l.b16 %v1496
  %v1513 = vunpack.c.l.b16 %v1497
  %v1514 = vunpack.c.l.b16 %v1498
  %v1515 = vunpack.c.l.b16 %v1499
  %v1516 = vunpack.c.l.b16 %v1500
  %v1517 = vunpack.c.l.b16 %v1501
  %v1518 = vpack.c.b16 %v1511, %v1510
  %v1519 = vpack.c.b16 %v1513, %v1512
  %v1520 = vpack.c.b16 %v1515, %v1514
  %v1521 = vpack.c.b16 %v1517, %v1516
  %v1523 = vsel %vm1023, %v1518, 0
  %v1526 = vsel %vm1023, %v1519, 0
  %v1529 = vsel %vm1023, %v1520, 0
  %v1532 = vsel %vm1023, %v1521, 0
  %1534 = vmatprep.subr.bf16.mxu0 0
  %1535 = vmatpush1.bf16.msra.mxu0 %v1490
  %1536 = vmatprep.subr.bf16.mxu0 0
  %1537 = vmatpush1.bf16.msra.mxu0 %v1491
  %1538 = vmatprep.subr.bf16.mxu0 0
  %1539 = vmatpush1.bf16.msra.mxu0 %v1246
  %1540 = vmatprep.subr.bf16.mxu0 0
  %1541 = vmatpush1.bf16.msra.mxu0 %v1247
  %1542 = vmatprep.subr.bf16.mxu0 0
  %1543 = vmatpush1.bf16.msra.mxu0 %v1492
  %1544 = vmatprep.subr.bf16.mxu0 0
  %1545 = vmatpush1.bf16.msra.mxu0 %v1493
  %1546 = vmatprep.subr.bf16.mxu0 0
  %1547 = vmatpush1.bf16.msra.mxu0 0
  %1548 = vmatprep.subr.bf16.mxu0 0
  %1549 = vmatpush1.bf16.msra.mxu0 0
  %1550 = vmatprep.subr.bf16.mxu0 0
  %1551 = vmatpush1.bf16.msra.mxu0 0
  %1552 = vmatprep.subr.bf16.mxu0 0
  %1553 = vmatpush1.bf16.msra.mxu0 0
  %1554 = vmatprep.subr.bf16.mxu0 0
  %1555 = vmatpush1.bf16.msra.mxu0 0
  %1556 = vmatprep.subr.bf16.mxu0 0
  %1557 = vmatpush1.bf16.msra.mxu0 0
  %1558 = vmatprep.subr.bf16.mxu0 0
  %1559 = vmatpush1.bf16.msra.mxu0 0
  %1560 = vmatprep.subr.bf16.mxu0 0
  %1561 = vmatpush1.bf16.msra.mxu0 0
  %1562 = vmatprep.subr.bf16.mxu0 0
  %1563 = vmatpush1.bf16.msra.mxu0 0
  %1564 = vmatprep.subr.bf16.mxu0 0
  %1565 = vmatpush1.bf16.msra.mxu0 0
  %1566 = vmatprep.mubr.bf16.mxu0 0
  %1567 = vmatmul.mubr.bf16.gmra.mrb[0].mxu0 %v1523
  %v1568 = vpop.f32.mrb[0].mxu0
  %v1569 = vadd.f32 0.0, %v1568
  %v1570 = vpop.f32.mrb[0].mxu0
  %v1571 = vpop.f32.mrb[0].mxu0
  %v1572 = vadd.f32 0.0, %v1571
  %v1573 = vpop.f32.mrb[0].mxu0
  %1574 = vmatprep.mubr.bf16.mxu0 0
  %1575 = vmatmul.mubr.bf16.gmra.mrb[0].mxu0 %v1526
  %v1576 = vpop.f32.mrb[0].mxu0
  %v1577 = vadd.f32 0.0, %v1576
  %v1578 = vpop.f32.mrb[0].mxu0
  %v1579 = vpop.f32.mrb[0].mxu0
  %v1580 = vadd.f32 0.0, %v1579
  %v1581 = vpop.f32.mrb[0].mxu0
  %1582 = vmatprep.mubr.bf16.mxu0 0
  %1583 = vmatmul.mubr.bf16.gmra.mrb[0].mxu0 %v1529
  %v1584 = vpop.f32.mrb[0].mxu0
  %v1585 = vadd.f32 0.0, %v1584
  %v1586 = vpop.f32.mrb[0].mxu0
  %v1587 = vpop.f32.mrb[0].mxu0
  %v1588 = vadd.f32 0.0, %v1587
  %v1589 = vpop.f32.mrb[0].mxu0
  %1590 = vmatprep.mubr.bf16.mxu0 0
  %1591 = vmatmul.mubr.bf16.gmra.mrb[0].mxu0 %v1532
  %v1592 = vpop.f32.mrb[0].mxu0
  %v1593 = vadd.f32 0.0, %v1592
  %v1594 = vpop.f32.mrb[0].mxu0
  %v1595 = vpop.f32.mrb[0].mxu0
  %v1596 = vadd.f32 0.0, %v1595
  %v1597 = vpop.f32.mrb[0].mxu0
  %1598 = vdwg.mxu0
  %v1599 = vld [vmem:[%s69] sm:$0xff]
  %v1600 = vld [vmem:[%s69 + $0x8] sm:$0xff]
  %v1601 = vld [vmem:[%s69 + $0x10] sm:$0xff]
  %v1602 = vld [vmem:[%s69 + $0x18] sm:$0xff]
  %v1603 = vld [vmem:[%s69 + $0x20] sm:$0xff]
  %v1604 = vld [vmem:[%s69 + $0x28] sm:$0xff]
  %v1605 = vld [vmem:[%s69 + $0x30] sm:$0xff]
  %v1606 = vld [vmem:[%s69 + $0x38] sm:$0xff]
  %1608 = vset.pattern.permute.xlu0 0
  %1609 = vperm.xlu0 %1608, %v1599
  %v1610 = vpop.permute.xlu0 %1609
  %1613 = vset.pattern.permute.xlu0 0
  %1614 = vperm.xlu0 %1613, %v1600
  %v1615 = vpop.permute.xlu0 %1614
  %1618 = vset.pattern.permute.xlu0 0
  %1619 = vperm.xlu0 %1618, %v1601
  %v1620 = vpop.permute.xlu0 %1619
  %1623 = vset.pattern.permute.xlu0 0
  %1624 = vperm.xlu0 %1623, %v1602
  %v1625 = vpop.permute.xlu0 %1624
  %1628 = vset.pattern.permute.xlu0 0
  %1629 = vperm.xlu0 %1628, %v1603
  %v1630 = vpop.permute.xlu0 %1629
  %1633 = vset.pattern.permute.xlu0 0
  %1634 = vperm.xlu0 %1633, %v1604
  %v1635 = vpop.permute.xlu0 %1634
  %1638 = vset.pattern.permute.xlu0 0
  %1639 = vperm.xlu0 %1638, %v1605
  %v1640 = vpop.permute.xlu0 %1639
  %1643 = vset.pattern.permute.xlu0 0
  %1644 = vperm.xlu0 %1643, %v1606
  %v1645 = vpop.permute.xlu0 %1644
  %v1647 = vmul.f32 %v1569, %v1610
  %v1648 = vmul.f32 %v1572, %v1615
  %v1649 = vmul.f32 %v1577, %v1620
  %v1650 = vmul.f32 %v1580, %v1625
  %v1651 = vmul.f32 %v1585, %v1630
  %v1652 = vmul.f32 %v1588, %v1635
  %v1653 = vmul.f32 %v1593, %v1640
  %v1654 = vmul.f32 %v1596, %v1645
  %v1655 = vld [vmem:[%s71] sm:$0xff]
  %v1656 = vld [vmem:[%s71 + $0x8] sm:$0xff]
  %v1657 = vld [vmem:[%s71 + $0x10] sm:$0xff]
  %v1658 = vld [vmem:[%s71 + $0x18] sm:$0xff]
  %v1659 = vld [vmem:[%s71 + $0x20] sm:$0xff]
  %v1660 = vld [vmem:[%s71 + $0x28] sm:$0xff]
  %v1661 = vld [vmem:[%s71 + $0x30] sm:$0xff]
  %v1662 = vld [vmem:[%s71 + $0x38] sm:$0xff]
  %1664 = vset.pattern.permute.xlu0 0
  %1665 = vperm.xlu0 %1664, %v1655
  %v1666 = vpop.permute.xlu0 %1665
  %1669 = vset.pattern.permute.xlu0 0
  %1670 = vperm.xlu0 %1669, %v1656
  %v1671 = vpop.permute.xlu0 %1670
  %1674 = vset.pattern.permute.xlu0 0
  %1675 = vperm.xlu0 %1674, %v1657
  %v1676 = vpop.permute.xlu0 %1675
  %1679 = vset.pattern.permute.xlu0 0
  %1680 = vperm.xlu0 %1679, %v1658
  %v1681 = vpop.permute.xlu0 %1680
  %1684 = vset.pattern.permute.xlu0 0
  %1685 = vperm.xlu0 %1684, %v1659
  %v1686 = vpop.permute.xlu0 %1685
  %1689 = vset.pattern.permute.xlu0 0
  %1690 = vperm.xlu0 %1689, %v1660
  %v1691 = vpop.permute.xlu0 %1690
  %1694 = vset.pattern.permute.xlu0 0
  %1695 = vperm.xlu0 %1694, %v1661
  %v1696 = vpop.permute.xlu0 %1695
  %1699 = vset.pattern.permute.xlu0 0
  %1700 = vperm.xlu0 %1699, %v1662
  %v1701 = vpop.permute.xlu0 %1700
  %v1703 = vadd.f32 %v1647, %v1666
  %v1704 = vadd.f32 %v1648, %v1671
  %v1705 = vadd.f32 %v1649, %v1676
  %v1706 = vadd.f32 %v1650, %v1681
  %v1707 = vadd.f32 %v1651, %v1686
  %v1708 = vadd.f32 %v1652, %v1691
  %v1709 = vadd.f32 %v1653, %v1696
  %v1710 = vadd.f32 %v1654, %v1701
  %v1711 = vmax.f32 %v1703, 0.0
  %v1712 = vmax.f32 %v1704, 0.0
  %v1713 = vmax.f32 %v1705, 0.0
  %v1714 = vmax.f32 %v1706, 0.0
  %v1715 = vmax.f32 %v1707, 0.0
  %v1716 = vmax.f32 %v1708, 0.0
  %v1717 = vmax.f32 %v1709, 0.0
  %v1718 = vmax.f32 %v1710, 0.0
  %1719 = vrot.lane.b32.xlu0 %v1711, 1
  %v1720 = vpop.permute.xlu0 %1719
  %1721 = vrot.lane.b32.xlu0 %v1712, 1
  %v1722 = vpop.permute.xlu0 %1721
  %1723 = vrot.lane.b32.xlu0 %v1713, 1
  %v1724 = vpop.permute.xlu0 %1723
  %1725 = vrot.lane.b32.xlu0 %v1714, 1
  %v1726 = vpop.permute.xlu0 %1725
  %1727 = vrot.lane.b32.xlu0 %v1715, 1
  %v1728 = vpop.permute.xlu0 %1727
  %1729 = vrot.lane.b32.xlu0 %v1716, 1
  %v1730 = vpop.permute.xlu0 %1729
  %1731 = vrot.lane.b32.xlu0 %v1717, 1
  %v1732 = vpop.permute.xlu0 %1731
  %1733 = vrot.lane.b32.xlu0 %v1718, 1
  %v1734 = vpop.permute.xlu0 %1733
  %v1735 = vmul.f32 %v1720, %v209
  %v1736 = vmul.f32 %v1722, %v209
  %v1737 = vmul.f32 %v1724, %v209
  %v1738 = vmul.f32 %v1726, %v209
  %v1739 = vmul.f32 %v1728, %v209
  %v1740 = vmul.f32 %v1730, %v209
  %v1741 = vmul.f32 %v1732, %v209
  %v1742 = vmul.f32 %v1734, %v209
  %1743 = vrot.lane.b32.xlu0 %v1711, 127
  %v1744 = vpop.permute.xlu0 %1743
  %1745 = vrot.lane.b32.xlu0 %v1712, 127
  %v1746 = vpop.permute.xlu0 %1745
  %1747 = vrot.lane.b32.xlu0 %v1713, 127
  %v1748 = vpop.permute.xlu0 %1747
  %1749 = vrot.lane.b32.xlu0 %v1714, 127
  %v1750 = vpop.permute.xlu0 %1749
  %1751 = vrot.lane.b32.xlu0 %v1715, 127
  %v1752 = vpop.permute.xlu0 %1751
  %1753 = vrot.lane.b32.xlu0 %v1716, 127
  %v1754 = vpop.permute.xlu0 %1753
  %1755 = vrot.lane.b32.xlu0 %v1717, 127
  %v1756 = vpop.permute.xlu0 %1755
  %1757 = vrot.lane.b32.xlu0 %v1718, 127
  %v1758 = vpop.permute.xlu0 %1757
  %v1759 = vmul.f32 %v1744, %v229
  %v1760 = vmul.f32 %v1746, %v229
  %v1761 = vmul.f32 %v1748, %v229
  %v1762 = vmul.f32 %v1750, %v229
  %v1763 = vmul.f32 %v1752, %v229
  %v1764 = vmul.f32 %v1754, %v229
  %v1765 = vmul.f32 %v1756, %v229
  %v1766 = vmul.f32 %v1758, %v229
  %v1767 = vpack.c.bf16 %v1736, %v1735
  %v1768 = vpack.c.bf16 %v1738, %v1737
  %v1769 = vpack.c.bf16 %v1740, %v1739
  %v1770 = vpack.c.bf16 %v1742, %v1741
  %v1771 = vpack.c.bf16 %v1712, %v1711
  %v1772 = vpack.c.bf16 %v1714, %v1713
  %v1773 = vpack.c.bf16 %v1716, %v1715
  %v1774 = vpack.c.bf16 %v1718, %v1717
  %v1775 = vpack.c.bf16 %v1760, %v1759
  %v1776 = vpack.c.bf16 %v1762, %v1761
  %v1777 = vpack.c.bf16 %v1764, %v1763
  %v1778 = vpack.c.bf16 %v1766, %v1765
  %v1779 = vld [vmem:[%s73] sm:$0xff]
  %v1780 = vld [vmem:[%s73 + $0x8] sm:$0xff]
  %v1781 = vld [vmem:[%s73 + $0x10] sm:$0xff]
  %v1782 = vld [vmem:[%s73 + $0x18] sm:$0xff]
  %v1787 = vunpack.c.l.b16 %v1779
  %v1788 = vunpack.c.h.b16 %v1779
  %v1789 = vunpack.c.l.b16 %v1780
  %v1790 = vunpack.c.h.b16 %v1780
  %v1791 = vunpack.c.l.b16 %v1781
  %v1792 = vunpack.c.h.b16 %v1781
  %v1793 = vunpack.c.l.b16 %v1782
  %v1794 = vunpack.c.h.b16 %v1782
  %v1795 = vpack.c.b16 %v1789, %v1787
  %v1796 = vpack.c.b16 %v1790, %v1788
  %v1797 = vpack.c.b16 %v1793, %v1791
  %v1798 = vpack.c.b16 %v1794, %v1792
  %vm1801 = vcmask 523264
  %v1803 = vsel %vm1801, %v1796, 0
  %v1806 = vsel %vm1801, %v1798, 0
  %1808 = vmatprep.subr.bf16.mxu0 0
  %1809 = vmatpush1.bf16.msra.mxu0 %v1767
  %1810 = vmatprep.subr.bf16.mxu0 0
  %1811 = vmatpush1.bf16.msra.mxu0 %v1768
  %1812 = vmatprep.subr.bf16.mxu0 0
  %1813 = vmatpush1.bf16.msra.mxu0 %v1769
  %1814 = vmatprep.subr.bf16.mxu0 0
  %1815 = vmatpush1.bf16.msra.mxu0 %v1770
  %1816 = vmatprep.subr.bf16.mxu0 0
  %1817 = vmatpush1.bf16.msra.mxu0 %v1771
  %1818 = vmatprep.subr.bf16.mxu0 0
  %1819 = vmatpush1.bf16.msra.mxu0 %v1772
  %1820 = vmatprep.subr.bf16.mxu0 0
  %1821 = vmatpush1.bf16.msra.mxu0 %v1773
  %1822 = vmatprep.subr.bf16.mxu0 0
  %1823 = vmatpush1.bf16.msra.mxu0 %v1774
  %1824 = vmatprep.subr.bf16.mxu0 0
  %1825 = vmatpush1.bf16.msra.mxu0 %v1775
  %1826 = vmatprep.subr.bf16.mxu0 0
  %1827 = vmatpush1.bf16.msra.mxu0 %v1776
  %1828 = vmatprep.subr.bf16.mxu0 0
  %1829 = vmatpush1.bf16.msra.mxu0 %v1777
  %1830 = vmatprep.subr.bf16.mxu0 0
  %1831 = vmatpush1.bf16.msra.mxu0 %v1778
  %1832 = vmatprep.subr.bf16.mxu0 0
  %1833 = vmatpush1.bf16.msra.mxu0 0
  %1834 = vmatprep.subr.bf16.mxu0 0
  %1835 = vmatpush1.bf16.msra.mxu0 0
  %1836 = vmatprep.subr.bf16.mxu0 0
  %1837 = vmatpush1.bf16.msra.mxu0 0
  %1838 = vmatprep.subr.bf16.mxu0 0
  %1839 = vmatpush1.bf16.msra.mxu0 0
  %1840 = vmatprep.mubr.bf16.mxu0 %v1803
  %1841 = vmatmul.mubr.bf16.gmra.mrb[0].mxu0 %v1795
  %v1842 = vpop.f32.mrb[0].mxu0
  %v1843 = vadd.f32 0.0, %v1842
  %v1844 = vpop.f32.mrb[0].mxu0
  %v1845 = vpop.f32.mrb[0].mxu0
  %v1846 = vadd.f32 0.0, %v1845
  %v1847 = vpop.f32.mrb[0].mxu0
  %1848 = vmatprep.mubr.bf16.mxu0 %v1806
  %1849 = vmatmul.mubr.bf16.gmra.mrb[0].mxu0 %v1797
  %v1850 = vpop.f32.mrb[0].mxu0
  %v1851 = vadd.f32 0.0, %v1850
  %v1852 = vpop.f32.mrb[0].mxu0
  %v1853 = vpop.f32.mrb[0].mxu0
  %v1854 = vadd.f32 0.0, %v1853
  %v1855 = vpop.f32.mrb[0].mxu0
  %1856 = vdwg.mxu0
  %v1857 = vld [vmem:[%s75] sm:$0xff]
  %v1858 = vld [vmem:[%s75 + $0x8] sm:$0xff]
  %v1859 = vld [vmem:[%s75 + $0x10] sm:$0xff]
  %v1860 = vld [vmem:[%s75 + $0x18] sm:$0xff]
  %1862 = vset.pattern.permute.xlu0 0
  %1863 = vperm.xlu0 %1862, %v1857
  %v1864 = vpop.permute.xlu0 %1863
  %1867 = vset.pattern.permute.xlu0 0
  %1868 = vperm.xlu0 %1867, %v1858
  %v1869 = vpop.permute.xlu0 %1868
  %1872 = vset.pattern.permute.xlu0 0
  %1873 = vperm.xlu0 %1872, %v1859
  %v1874 = vpop.permute.xlu0 %1873
  %1877 = vset.pattern.permute.xlu0 0
  %1878 = vperm.xlu0 %1877, %v1860
  %v1879 = vpop.permute.xlu0 %1878
  %v1881 = vmul.f32 %v1843, %v1864
  %v1882 = vmul.f32 %v1846, %v1869
  %v1883 = vmul.f32 %v1851, %v1874
  %v1884 = vmul.f32 %v1854, %v1879
  %v1885 = vld [vmem:[%s77] sm:$0xff]
  %v1886 = vld [vmem:[%s77 + $0x8] sm:$0xff]
  %v1887 = vld [vmem:[%s77 + $0x10] sm:$0xff]
  %v1888 = vld [vmem:[%s77 + $0x18] sm:$0xff]
  %1890 = vset.pattern.permute.xlu0 0
  %1891 = vperm.xlu0 %1890, %v1885
  %v1892 = vpop.permute.xlu0 %1891
  %1895 = vset.pattern.permute.xlu0 0
  %1896 = vperm.xlu0 %1895, %v1886
  %v1897 = vpop.permute.xlu0 %1896
  %1900 = vset.pattern.permute.xlu0 0
  %1901 = vperm.xlu0 %1900, %v1887
  %v1902 = vpop.permute.xlu0 %1901
  %1905 = vset.pattern.permute.xlu0 0
  %1906 = vperm.xlu0 %1905, %v1888
  %v1907 = vpop.permute.xlu0 %1906
  %v1909 = vadd.f32 %v1881, %v1892
  %v1910 = vadd.f32 %v1882, %v1897
  %v1911 = vadd.f32 %v1883, %v1902
  %v1912 = vadd.f32 %v1884, %v1907
  %v1913 = vmax.f32 %v1909, 0.0
  %v1914 = vmax.f32 %v1910, 0.0
  %v1915 = vmax.f32 %v1911, 0.0
  %v1916 = vmax.f32 %v1912, 0.0
  %1917 = vrot.lane.b32.xlu0 %v1913, 1
  %v1918 = vpop.permute.xlu0 %1917
  %1919 = vrot.lane.b32.xlu0 %v1914, 1
  %v1920 = vpop.permute.xlu0 %1919
  %1921 = vrot.lane.b32.xlu0 %v1915, 1
  %v1922 = vpop.permute.xlu0 %1921
  %1923 = vrot.lane.b32.xlu0 %v1916, 1
  %v1924 = vpop.permute.xlu0 %1923
  %v1925 = vmul.f32 %v1918, %v209
  %v1926 = vmul.f32 %v1920, %v209
  %v1927 = vmul.f32 %v1922, %v209
  %v1928 = vmul.f32 %v1924, %v209
  %1929 = vrot.lane.b32.xlu0 %v1913, 127
  %v1930 = vpop.permute.xlu0 %1929
  %1931 = vrot.lane.b32.xlu0 %v1914, 127
  %v1932 = vpop.permute.xlu0 %1931
  %1933 = vrot.lane.b32.xlu0 %v1915, 127
  %v1934 = vpop.permute.xlu0 %1933
  %1935 = vrot.lane.b32.xlu0 %v1916, 127
  %v1936 = vpop.permute.xlu0 %1935
  %v1937 = vmul.f32 %v1930, %v229
  %v1938 = vmul.f32 %v1932, %v229
  %v1939 = vmul.f32 %v1934, %v229
  %v1940 = vmul.f32 %v1936, %v229
  %v1941 = vpack.c.bf16 %v1926, %v1925
  %v1942 = vpack.c.bf16 %v1928, %v1927
  %v1943 = vpack.c.bf16 %v1914, %v1913
  %v1944 = vpack.c.bf16 %v1916, %v1915
  %v1945 = vpack.c.bf16 %v1938, %v1937
  %v1946 = vpack.c.bf16 %v1940, %v1939
  %v1947 = vld [vmem:[%s79] sm:$0xf]
  %v1948 = vld [vmem:[%s79 + $0x4] sm:$0xf]
  %v1949 = vld [vmem:[%s79 + $0x8] sm:$0xf]
  %v1950 = vld [vmem:[%s79 + $0xc] sm:$0xf]
  %v1951 = vld [vmem:[%s79 + $0x10] sm:$0xf]
  %v1952 = vld [vmem:[%s79 + $0x14] sm:$0xf]
  %v1953 = vld [vmem:[%s79 + $0x18] sm:$0xf]
  %v1954 = vld [vmem:[%s79 + $0x1c] sm:$0xf]
  %v1963 = vunpack.c.l.b16 %v1947
  %v1964 = vunpack.c.l.b16 %v1948
  %v1965 = vunpack.c.l.b16 %v1949
  %v1966 = vunpack.c.l.b16 %v1950
  %v1967 = vunpack.c.l.b16 %v1951
  %v1968 = vunpack.c.l.b16 %v1952
  %v1969 = vunpack.c.l.b16 %v1953
  %v1970 = vunpack.c.l.b16 %v1954
  %v1971 = vpack.c.b16 %v1964, %v1963
  %v1972 = vpack.c.b16 %v1966, %v1965
  %v1973 = vpack.c.b16 %v1968, %v1967
  %v1974 = vpack.c.b16 %v1970, %v1969
  %v1976 = vsel %vm1023, %v1971, 0
  %v1979 = vsel %vm1023, %v1972, 0
  %v1982 = vsel %vm1023, %v1973, 0
  %v1985 = vsel %vm1023, %v1974, 0
  %1987 = vmatprep.subr.bf16.mxu0 0
  %1988 = vmatpush1.bf16.msra.mxu0 %v1941
  %1989 = vmatprep.subr.bf16.mxu0 0
  %1990 = vmatpush1.bf16.msra.mxu0 %v1942
  %1991 = vmatprep.subr.bf16.mxu0 0
  %1992 = vmatpush1.bf16.msra.mxu0 %v1943
  %1993 = vmatprep.subr.bf16.mxu0 0
  %1994 = vmatpush1.bf16.msra.mxu0 %v1944
  %1995 = vmatprep.subr.bf16.mxu0 0
  %1996 = vmatpush1.bf16.msra.mxu0 %v1945
  %1997 = vmatprep.subr.bf16.mxu0 0
  %1998 = vmatpush1.bf16.msra.mxu0 %v1946
  %1999 = vmatprep.subr.bf16.mxu0 0
  %2000 = vmatpush1.bf16.msra.mxu0 0
  %2001 = vmatprep.subr.bf16.mxu0 0
  %2002 = vmatpush1.bf16.msra.mxu0 0
  %2003 = vmatprep.subr.bf16.mxu0 0
  %2004 = vmatpush1.bf16.msra.mxu0 0
  %2005 = vmatprep.subr.bf16.mxu0 0
  %2006 = vmatpush1.bf16.msra.mxu0 0
  %2007 = vmatprep.subr.bf16.mxu0 0
  %2008 = vmatpush1.bf16.msra.mxu0 0
  %2009 = vmatprep.subr.bf16.mxu0 0
  %2010 = vmatpush1.bf16.msra.mxu0 0
  %2011 = vmatprep.subr.bf16.mxu0 0
  %2012 = vmatpush1.bf16.msra.mxu0 0
  %2013 = vmatprep.subr.bf16.mxu0 0
  %2014 = vmatpush1.bf16.msra.mxu0 0
  %2015 = vmatprep.subr.bf16.mxu0 0
  %2016 = vmatpush1.bf16.msra.mxu0 0
  %2017 = vmatprep.subr.bf16.mxu0 0
  %2018 = vmatpush1.bf16.msra.mxu0 0
  %2019 = vmatprep.mubr.bf16.mxu0 0
  %2020 = vmatmul.mubr.bf16.gmra.mrb[0].mxu0 %v1976
  %v2021 = vpop.f32.mrb[0].mxu0
  %v2022 = vadd.f32 0.0, %v2021
  %v2023 = vpop.f32.mrb[0].mxu0
  %v2024 = vpop.f32.mrb[0].mxu0
  %v2025 = vadd.f32 0.0, %v2024
  %v2026 = vpop.f32.mrb[0].mxu0
  %2027 = vmatprep.mubr.bf16.mxu0 0
  %2028 = vmatmul.mubr.bf16.gmra.mrb[0].mxu0 %v1979
  %v2029 = vpop.f32.mrb[0].mxu0
  %v2030 = vadd.f32 0.0, %v2029
  %v2031 = vpop.f32.mrb[0].mxu0
  %v2032 = vpop.f32.mrb[0].mxu0
  %v2033 = vadd.f32 0.0, %v2032
  %v2034 = vpop.f32.mrb[0].mxu0
  %2035 = vmatprep.mubr.bf16.mxu0 0
  %2036 = vmatmul.mubr.bf16.gmra.mrb[0].mxu0 %v1982
  %v2037 = vpop.f32.mrb[0].mxu0
  %v2038 = vadd.f32 0.0, %v2037
  %v2039 = vpop.f32.mrb[0].mxu0
  %v2040 = vpop.f32.mrb[0].mxu0
  %v2041 = vadd.f32 0.0, %v2040
  %v2042 = vpop.f32.mrb[0].mxu0
  %2043 = vmatprep.mubr.bf16.mxu0 0
  %2044 = vmatmul.mubr.bf16.gmra.mrb[0].mxu0 %v1985
  %v2045 = vpop.f32.mrb[0].mxu0
  %v2046 = vadd.f32 0.0, %v2045
  %v2047 = vpop.f32.mrb[0].mxu0
  %v2048 = vpop.f32.mrb[0].mxu0
  %v2049 = vadd.f32 0.0, %v2048
  %v2050 = vpop.f32.mrb[0].mxu0
  %2051 = vdwg.mxu0
  %v2052 = vld [vmem:[%s81] sm:$0xff]
  %v2053 = vld [vmem:[%s81 + $0x8] sm:$0xff]
  %v2054 = vld [vmem:[%s81 + $0x10] sm:$0xff]
  %v2055 = vld [vmem:[%s81 + $0x18] sm:$0xff]
  %v2056 = vld [vmem:[%s81 + $0x20] sm:$0xff]
  %v2057 = vld [vmem:[%s81 + $0x28] sm:$0xff]
  %v2058 = vld [vmem:[%s81 + $0x30] sm:$0xff]
  %v2059 = vld [vmem:[%s81 + $0x38] sm:$0xff]
  %2061 = vset.pattern.permute.xlu0 0
  %2062 = vperm.xlu0 %2061, %v2052
  %v2063 = vpop.permute.xlu0 %2062
  %2066 = vset.pattern.permute.xlu0 0
  %2067 = vperm.xlu0 %2066, %v2053
  %v2068 = vpop.permute.xlu0 %2067
  %2071 = vset.pattern.permute.xlu0 0
  %2072 = vperm.xlu0 %2071, %v2054
  %v2073 = vpop.permute.xlu0 %2072
  %2076 = vset.pattern.permute.xlu0 0
  %2077 = vperm.xlu0 %2076, %v2055
  %v2078 = vpop.permute.xlu0 %2077
  %2081 = vset.pattern.permute.xlu0 0
  %2082 = vperm.xlu0 %2081, %v2056
  %v2083 = vpop.permute.xlu0 %2082
  %2086 = vset.pattern.permute.xlu0 0
  %2087 = vperm.xlu0 %2086, %v2057
  %v2088 = vpop.permute.xlu0 %2087
  %2091 = vset.pattern.permute.xlu0 0
  %2092 = vperm.xlu0 %2091, %v2058
  %v2093 = vpop.permute.xlu0 %2092
  %2096 = vset.pattern.permute.xlu0 0
  %2097 = vperm.xlu0 %2096, %v2059
  %v2098 = vpop.permute.xlu0 %2097
  %v2100 = vmul.f32 %v2022, %v2063
  %v2101 = vmul.f32 %v2025, %v2068
  %v2102 = vmul.f32 %v2030, %v2073
  %v2103 = vmul.f32 %v2033, %v2078
  %v2104 = vmul.f32 %v2038, %v2083
  %v2105 = vmul.f32 %v2041, %v2088
  %v2106 = vmul.f32 %v2046, %v2093
  %v2107 = vmul.f32 %v2049, %v2098
  %v2108 = vld [vmem:[%s83] sm:$0xff]
  %v2109 = vld [vmem:[%s83 + $0x8] sm:$0xff]
  %v2110 = vld [vmem:[%s83 + $0x10] sm:$0xff]
  %v2111 = vld [vmem:[%s83 + $0x18] sm:$0xff]
  %v2112 = vld [vmem:[%s83 + $0x20] sm:$0xff]
  %v2113 = vld [vmem:[%s83 + $0x28] sm:$0xff]
  %v2114 = vld [vmem:[%s83 + $0x30] sm:$0xff]
  %v2115 = vld [vmem:[%s83 + $0x38] sm:$0xff]
  %2117 = vset.pattern.permute.xlu0 0
  %2118 = vperm.xlu0 %2117, %v2108
  %v2119 = vpop.permute.xlu0 %2118
  %2122 = vset.pattern.permute.xlu0 0
  %2123 = vperm.xlu0 %2122, %v2109
  %v2124 = vpop.permute.xlu0 %2123
  %2127 = vset.pattern.permute.xlu0 0
  %2128 = vperm.xlu0 %2127, %v2110
  %v2129 = vpop.permute.xlu0 %2128
  %2132 = vset.pattern.permute.xlu0 0
  %2133 = vperm.xlu0 %2132, %v2111
  %v2134 = vpop.permute.xlu0 %2133
  %2137 = vset.pattern.permute.xlu0 0
  %2138 = vperm.xlu0 %2137, %v2112
  %v2139 = vpop.permute.xlu0 %2138
  %2142 = vset.pattern.permute.xlu0 0
  %2143 = vperm.xlu0 %2142, %v2113
  %v2144 = vpop.permute.xlu0 %2143
  %2147 = vset.pattern.permute.xlu0 0
  %2148 = vperm.xlu0 %2147, %v2114
  %v2149 = vpop.permute.xlu0 %2148
  %2152 = vset.pattern.permute.xlu0 0
  %2153 = vperm.xlu0 %2152, %v2115
  %v2154 = vpop.permute.xlu0 %2153
  %v2156 = vadd.f32 %v2100, %v2119
  %v2157 = vadd.f32 %v2101, %v2124
  %v2158 = vadd.f32 %v2102, %v2129
  %v2159 = vadd.f32 %v2103, %v2134
  %v2160 = vadd.f32 %v2104, %v2139
  %v2161 = vadd.f32 %v2105, %v2144
  %v2162 = vadd.f32 %v2106, %v2149
  %v2163 = vadd.f32 %v2107, %v2154
  %v2164 = vadd.f32 %v2156, %v1458
  %v2165 = vadd.f32 %v2157, %v1459
  %v2166 = vadd.f32 %v2158, %v1460
  %v2167 = vadd.f32 %v2159, %v1461
  %v2168 = vadd.f32 %v2160, %v1462
  %v2169 = vadd.f32 %v2161, %v1463
  %v2170 = vadd.f32 %v2162, %v1464
  %v2171 = vadd.f32 %v2163, %v1465
  %v2172 = vmax.f32 %v2164, 0.0
  %v2173 = vmax.f32 %v2165, 0.0
  %v2174 = vmax.f32 %v2166, 0.0
  %v2175 = vmax.f32 %v2167, 0.0
  %v2176 = vmax.f32 %v2168, 0.0
  %v2177 = vmax.f32 %v2169, 0.0
  %v2178 = vmax.f32 %v2170, 0.0
  %v2179 = vmax.f32 %v2171, 0.0
  %v2180 = vld [vmem:[%s11] sm:$0xff]
  %v2181 = vld [vmem:[%s11 + $0x8] sm:$0xff]
  %v2182 = vld [vmem:[%s11 + $0x10] sm:$0xff]
  %v2183 = vld [vmem:[%s11 + $0x18] sm:$0xff]
  %v2184 = vld [vmem:[%s11 + $0x20] sm:$0xff]
  %v2185 = vld [vmem:[%s11 + $0x28] sm:$0xff]
  %v2186 = vld [vmem:[%s11 + $0x30] sm:$0xff]
  %v2187 = vld [vmem:[%s11 + $0x38] sm:$0xff]
  %v2188 = vld [vmem:[%s11 + $0x40] sm:$0xff]
  %v2189 = vld [vmem:[%s11 + $0x48] sm:$0xff]
  %v2190 = vld [vmem:[%s11 + $0x50] sm:$0xff]
  %v2191 = vld [vmem:[%s11 + $0x58] sm:$0xff]
  %v2192 = vld [vmem:[%s11 + $0x60] sm:$0xff]
  %v2193 = vld [vmem:[%s11 + $0x68] sm:$0xff]
  %v2194 = vld [vmem:[%s11 + $0x70] sm:$0xff]
  %v2195 = vld [vmem:[%s11 + $0x78] sm:$0xff]
  %2196 = vmatprep.subr.mxu0 0.0
  %2197 = vmatpush1.msra.mxu0 %v2180
  %2198 = vmatprep.subr.mxu0 0.0
  %2199 = vmatpush1.msra.mxu0 %v2181
  %2200 = vmatprep.subr.mxu0 0.0
  %2201 = vmatpush1.msra.mxu0 %v2182
  %2202 = vmatprep.subr.mxu0 0.0
  %2203 = vmatpush1.msra.mxu0 %v2183
  %2204 = vmatprep.subr.mxu0 0.0
  %2205 = vmatpush1.msra.mxu0 %v2184
  %2206 = vmatprep.subr.mxu0 0.0
  %2207 = vmatpush1.msra.mxu0 %v2185
  %2208 = vmatprep.subr.mxu0 0.0
  %2209 = vmatpush1.msra.mxu0 %v2186
  %2210 = vmatprep.subr.mxu0 0.0
  %2211 = vmatpush1.msra.mxu0 %v2187
  %2212 = vmatprep.subr.mxu0 0.0
  %2213 = vmatpush1.msra.mxu0 %v2188
  %2214 = vmatprep.subr.mxu0 0.0
  %2215 = vmatpush1.msra.mxu0 %v2189
  %2216 = vmatprep.subr.mxu0 0.0
  %2217 = vmatpush1.msra.mxu0 %v2190
  %2218 = vmatprep.subr.mxu0 0.0
  %2219 = vmatpush1.msra.mxu0 %v2191
  %2220 = vmatprep.subr.mxu0 0.0
  %2221 = vmatpush1.msra.mxu0 %v2192
  %2222 = vmatprep.subr.mxu0 0.0
  %2223 = vmatpush1.msra.mxu0 %v2193
  %2224 = vmatprep.subr.mxu0 0.0
  %2225 = vmatpush1.msra.mxu0 %v2194
  %2226 = vmatprep.subr.mxu0 0.0
  %2227 = vmatpush1.msra.mxu0 %v2195
  %2228 = vmatprep.subr.mxu0 0.0
  %2229 = vmatpush1.msra.mxu0 0.0
  %2230 = vmatprep.subr.mxu0 0.0
  %2231 = vmatpush1.msra.mxu0 0.0
  %2232 = vmatprep.subr.mxu0 0.0
  %2233 = vmatpush1.msra.mxu0 0.0
  %2234 = vmatprep.subr.mxu0 0.0
  %2235 = vmatpush1.msra.mxu0 0.0
  %2236 = vmatprep.subr.mxu0 0.0
  %2237 = vmatpush1.msra.mxu0 0.0
  %2238 = vmatprep.subr.mxu0 0.0
  %2239 = vmatpush1.msra.mxu0 0.0
  %2240 = vmatprep.subr.mxu0 0.0
  %2241 = vmatpush1.msra.mxu0 0.0
  %2242 = vmatprep.subr.mxu0 0.0
  %2243 = vmatpush1.msra.mxu0 0.0
  %2244 = vmatprep.subr.mxu0 0.0
  %2245 = vmatpush1.msra.mxu0 0.0
  %2246 = vmatprep.subr.mxu0 0.0
  %2247 = vmatpush1.msra.mxu0 0.0
  %2248 = vmatprep.subr.mxu0 0.0
  %2249 = vmatpush1.msra.mxu0 0.0
  %2250 = vmatprep.subr.mxu0 0.0
  %2251 = vmatpush1.msra.mxu0 0.0
  %2252 = vmatprep.subr.mxu0 0.0
  %2253 = vmatpush1.msra.mxu0 0.0
  %2254 = vmatprep.subr.mxu0 0.0
  %2255 = vmatpush1.msra.mxu0 0.0
  %2256 = vmatprep.subr.mxu0 0.0
  %2257 = vmatpush1.msra.mxu0 0.0
  %2258 = vmatprep.subr.mxu0 0.0
  %2259 = vmatpush1.msra.mxu0 0.0
  %2260 = vmatprep.mubr.f32.mxu0 0.0
  %2261 = vmatmul.mubr.f32.gmra.mrb[0].mxu0 %v2172
  %v2262 = vpop.f32.mrb[0].mxu0
  %v2263 = vadd.f32 0.0, %v2262
  %v2264 = vpop.f32.mrb[0].mxu0
  %2265 = vmatprep.mubr.f32.mxu0 0.0
  %2266 = vmatmul.mubr.f32.gmra.mrb[0].mxu0 %v2173
  %v2267 = vpop.f32.mrb[0].mxu0
  %v2268 = vadd.f32 0.0, %v2267
  %v2269 = vpop.f32.mrb[0].mxu0
  %2270 = vmatprep.mubr.f32.mxu0 0.0
  %2271 = vmatmul.mubr.f32.gmra.mrb[0].mxu0 %v2174
  %v2272 = vpop.f32.mrb[0].mxu0
  %v2273 = vadd.f32 0.0, %v2272
  %v2274 = vpop.f32.mrb[0].mxu0
  %2275 = vmatprep.mubr.f32.mxu0 0.0
  %2276 = vmatmul.mubr.f32.gmra.mrb[0].mxu0 %v2175
  %v2277 = vpop.f32.mrb[0].mxu0
  %v2278 = vadd.f32 0.0, %v2277
  %v2279 = vpop.f32.mrb[0].mxu0
  %2280 = vmatprep.mubr.f32.mxu0 0.0
  %2281 = vmatmul.mubr.f32.gmra.mrb[0].mxu0 %v2176
  %v2282 = vpop.f32.mrb[0].mxu0
  %v2283 = vadd.f32 0.0, %v2282
  %v2284 = vpop.f32.mrb[0].mxu0
  %2285 = vmatprep.mubr.f32.mxu0 0.0
  %2286 = vmatmul.mubr.f32.gmra.mrb[0].mxu0 %v2177
  %v2287 = vpop.f32.mrb[0].mxu0
  %v2288 = vadd.f32 0.0, %v2287
  %v2289 = vpop.f32.mrb[0].mxu0
  %2290 = vmatprep.mubr.f32.mxu0 0.0
  %2291 = vmatmul.mubr.f32.gmra.mrb[0].mxu0 %v2178
  %v2292 = vpop.f32.mrb[0].mxu0
  %v2293 = vadd.f32 0.0, %v2292
  %v2294 = vpop.f32.mrb[0].mxu0
  %2295 = vmatprep.mubr.f32.mxu0 0.0
  %2296 = vmatmul.mubr.f32.gmra.mrb[0].mxu0 %v2179
  %v2297 = vpop.f32.mrb[0].mxu0
  %v2298 = vadd.f32 0.0, %v2297
  %v2299 = vpop.f32.mrb[0].mxu0
  %2300 = vdwg.mxu0
  %v2301 = vld [vmem:[%s91] sm:$0x3]
  %v2302 = vld [vmem:[%s93] sm:$0x3]
  %v2303 = vld [vmem:[%s5] sm:$0x1f]
  %vm2304 = vcmask 39936
  %v2306 = vsel %vm2304, %v2302, 0
  %v2309 = vsel %vm248, %v2303, 0
  %2311 = vmatprep.subr.mxu0 0.0
  %2312 = vmatpush1.msra.mxu0 %v2309
  %2313 = vmatprep.subr.mxu0 0.0
  %2314 = vmatpush1.msra.mxu0 0.0
  %2315 = vmatprep.subr.mxu0 0.0
  %2316 = vmatpush1.msra.mxu0 0.0
  %2317 = vmatprep.subr.mxu0 0.0
  %2318 = vmatpush1.msra.mxu0 0.0
  %2319 = vmatprep.subr.mxu0 0.0
  %2320 = vmatpush1.msra.mxu0 0.0
  %2321 = vmatprep.subr.mxu0 0.0
  %2322 = vmatpush1.msra.mxu0 0.0
  %2323 = vmatprep.subr.mxu0 0.0
  %2324 = vmatpush1.msra.mxu0 0.0
  %2325 = vmatprep.subr.mxu0 0.0
  %2326 = vmatpush1.msra.mxu0 0.0
  %2327 = vmatprep.subr.mxu0 0.0
  %2328 = vmatpush1.msra.mxu0 0.0
  %2329 = vmatprep.subr.mxu0 0.0
  %2330 = vmatpush1.msra.mxu0 0.0
  %2331 = vmatprep.subr.mxu0 0.0
  %2332 = vmatpush1.msra.mxu0 0.0
  %2333 = vmatprep.subr.mxu0 0.0
  %2334 = vmatpush1.msra.mxu0 0.0
  %2335 = vmatprep.subr.mxu0 0.0
  %2336 = vmatpush1.msra.mxu0 0.0
  %2337 = vmatprep.subr.mxu0 0.0
  %2338 = vmatpush1.msra.mxu0 0.0
  %2339 = vmatprep.subr.mxu0 0.0
  %2340 = vmatpush1.msra.mxu0 0.0
  %2341 = vmatprep.subr.mxu0 0.0
  %2342 = vmatpush1.msra.mxu0 0.0
  %2343 = vmatprep.subr.mxu0 0.0
  %2344 = vmatpush1.msra.mxu0 0.0
  %2345 = vmatprep.subr.mxu0 0.0
  %2346 = vmatpush1.msra.mxu0 0.0
  %2347 = vmatprep.subr.mxu0 0.0
  %2348 = vmatpush1.msra.mxu0 0.0
  %2349 = vmatprep.subr.mxu0 0.0
  %2350 = vmatpush1.msra.mxu0 0.0
  %2351 = vmatprep.subr.mxu0 0.0
  %2352 = vmatpush1.msra.mxu0 0.0
  %2353 = vmatprep.subr.mxu0 0.0
  %2354 = vmatpush1.msra.mxu0 0.0
  %2355 = vmatprep.subr.mxu0 0.0
  %2356 = vmatpush1.msra.mxu0 0.0
  %2357 = vmatprep.subr.mxu0 0.0
  %2358 = vmatpush1.msra.mxu0 0.0
  %2359 = vmatprep.subr.mxu0 0.0
  %2360 = vmatpush1.msra.mxu0 0.0
  %2361 = vmatprep.subr.mxu0 0.0
  %2362 = vmatpush1.msra.mxu0 0.0
  %2363 = vmatprep.subr.mxu0 0.0
  %2364 = vmatpush1.msra.mxu0 0.0
  %2365 = vmatprep.subr.mxu0 0.0
  %2366 = vmatpush1.msra.mxu0 0.0
  %2367 = vmatprep.subr.mxu0 0.0
  %2368 = vmatpush1.msra.mxu0 0.0
  %2369 = vmatprep.subr.mxu0 0.0
  %2370 = vmatpush1.msra.mxu0 0.0
  %2371 = vmatprep.subr.mxu0 0.0
  %2372 = vmatpush1.msra.mxu0 0.0
  %2373 = vmatprep.subr.mxu0 0.0
  %2374 = vmatpush1.msra.mxu0 0.0
  %2375 = vmatprep.mubr.f32.mxu0 0.0
  %2376 = vmatmul.mubr.f32.gmra.mrb[0].mxu0 %v2306
  %v2377 = vpop.f32.mrb[0].mxu0
  %v2378 = vadd.f32 0.0, %v2377
  %v2379 = vpop.f32.mrb[0].mxu0
  %2380 = vdwg.mxu0
  %v2382 = vsel %vm1801, %v2301, 0
  %2384 = vmatprep.subr.mxu0 0.0
  %2385 = vmatpush1.msra.mxu0 %v2263
  %2386 = vmatprep.subr.mxu0 0.0
  %2387 = vmatpush1.msra.mxu0 %v2268
  %2388 = vmatprep.subr.mxu0 0.0
  %2389 = vmatpush1.msra.mxu0 %v2273
  %2390 = vmatprep.subr.mxu0 0.0
  %2391 = vmatpush1.msra.mxu0 %v2278
  %2392 = vmatprep.subr.mxu0 0.0
  %2393 = vmatpush1.msra.mxu0 %v2283
  %2394 = vmatprep.subr.mxu0 0.0
  %2395 = vmatpush1.msra.mxu0 %v2288
  %2396 = vmatprep.subr.mxu0 0.0
  %2397 = vmatpush1.msra.mxu0 %v2293
  %2398 = vmatprep.subr.mxu0 0.0
  %2399 = vmatpush1.msra.mxu0 %v2298
  %2400 = vmatprep.subr.mxu0 0.0
  %2401 = vmatpush1.msra.mxu0 0.0
  %2402 = vmatprep.subr.mxu0 0.0
  %2403 = vmatpush1.msra.mxu0 0.0
  %2404 = vmatprep.subr.mxu0 0.0
  %2405 = vmatpush1.msra.mxu0 0.0
  %2406 = vmatprep.subr.mxu0 0.0
  %2407 = vmatpush1.msra.mxu0 0.0
  %2408 = vmatprep.subr.mxu0 0.0
  %2409 = vmatpush1.msra.mxu0 0.0
  %2410 = vmatprep.subr.mxu0 0.0
  %2411 = vmatpush1.msra.mxu0 0.0
  %2412 = vmatprep.subr.mxu0 0.0
  %2413 = vmatpush1.msra.mxu0 0.0
  %2414 = vmatprep.subr.mxu0 0.0
  %2415 = vmatpush1.msra.mxu0 0.0
  %2416 = vmatprep.subr.mxu0 0.0
  %2417 = vmatpush1.msra.mxu0 0.0
  %2418 = vmatprep.subr.mxu0 0.0
  %2419 = vmatpush1.msra.mxu0 0.0
  %2420 = vmatprep.subr.mxu0 0.0
  %2421 = vmatpush1.msra.mxu0 0.0
  %2422 = vmatprep.subr.mxu0 0.0
  %2423 = vmatpush1.msra.mxu0 0.0
  %2424 = vmatprep.subr.mxu0 0.0
  %2425 = vmatpush1.msra.mxu0 0.0
  %2426 = vmatprep.subr.mxu0 0.0
  %2427 = vmatpush1.msra.mxu0 0.0
  %2428 = vmatprep.subr.mxu0 0.0
  %2429 = vmatpush1.msra.mxu0 0.0
  %2430 = vmatprep.subr.mxu0 0.0
  %2431 = vmatpush1.msra.mxu0 0.0
  %2432 = vmatprep.subr.mxu0 0.0
  %2433 = vmatpush1.msra.mxu0 0.0
  %2434 = vmatprep.subr.mxu0 0.0
  %2435 = vmatpush1.msra.mxu0 0.0
  %2436 = vmatprep.subr.mxu0 0.0
  %2437 = vmatpush1.msra.mxu0 0.0
  %2438 = vmatprep.subr.mxu0 0.0
  %2439 = vmatpush1.msra.mxu0 0.0
  %2440 = vmatprep.subr.mxu0 0.0
  %2441 = vmatpush1.msra.mxu0 0.0
  %2442 = vmatprep.subr.mxu0 0.0
  %2443 = vmatpush1.msra.mxu0 0.0
  %2444 = vmatprep.subr.mxu0 0.0
  %2445 = vmatpush1.msra.mxu0 0.0
  %2446 = vmatprep.subr.mxu0 0.0
  %2447 = vmatpush1.msra.mxu0 0.0
  %2448 = vmatprep.mubr.f32.mxu0 0.0
  %2449 = vmatmul.mubr.f32.gmra.mrb[0].mxu0 %v2382
  %v2450 = vpop.f32.mrb[0].mxu0
  %v2451 = vadd.f32 %v2378, %v2450
  %v2452 = vpop.f32.mrb[0].mxu0
  %2453 = vdwg.mxu0
  %v2454 = vld [vmem:[%s95] sm:$0x3]
  %2456 = vset.pattern.permute.xlu0 0
  %2457 = vperm.xlu0 %2456, %v2454
  %v2458 = vpop.permute.xlu0 %2457
  %v2460 = vadd.f32 %v2451, %v2458
  %vm2461 = vcmask 9216
  %2462 = vst.msk [vmem:[%s97] sm:$0x3] %vm2461, %v2460
  // Predicated region
  $region194: #{dnn_forward.1} parent=0 // pred_check
    _
  $region195: #{dnn_forward.1} parent=0 // pred_check_branch
    %2464 = sbr.rel (0) target = $region197
  $region196: #{dnn_forward.1} parent=0 // pred_region
    _
  $region197: #{dnn_forward.1} parent=0 // pred_fallthru
    _
  // Predicated region
  $region198: #{dnn_forward.1} parent=0 // pred_check
    _
  $region199: #{dnn_forward.1} parent=0 // pred_check_branch
    %2466 = sbr.rel (0) target = $region201
  $region200: #{dnn_forward.1} parent=0 // pred_region
    _
  $region201: #{dnn_forward.1} parent=0 // pred_fallthru
    _

</llo_original>
